<compile_context>
chip_gen: v7x
topology: tpu7x:2x2x1
jax: 0.10.0
libtpu: 0.0.40
codegen_flags: <defaults>
</compile_context>

<pallas_src>
import functools

import jax
import jax.numpy as jnp
import numpy as np
from jax.experimental import pallas as pl
from jax.experimental.pallas import tpu as pltpu


def _lstm_kernel(x_ref, wih_ref, whh_ref, b_ref, wfc_ref, bfc_ref, out_ref,
                 *, hidden_dim, seq_len, approx_sigmoid):
    """Single-invocation LSTM recurrence + deferred, lane-dense FC.

    x_ref   : (T, D)      input rows for the one batch element consumed
    wih_ref : (D, 4H)     (f32 or bf16)
    whh_ref : (H, 4H)     (f32 or bf16)
    b_ref   : (1, 4H)     f32
    wfc_ref : (H, Opad)   (f32 or bf16), lane-padded to a multiple of 128
    bfc_ref : (1, Opad)   f32, lane-padded
    out_ref : (T, Opad)   f32
    """
    H = hidden_dim
    T = seq_len
    mxu_dtype = whh_ref.dtype

    # Prologue: input projection hoisted out of the recurrence, kept in vregs.
    #   (T, D) @ (D, 4H) + b  ->  (T, 4H) f32 value (4 vregs at T=8, H=128).
    pg = (jnp.dot(x_ref[...], wih_ref[...],
                  preferred_element_type=jnp.float32)
          + b_ref[...])

    def sigmoid(v):
        if approx_sigmoid:
            # exp on the EUP, then approx reciprocal also on the EUP slot.
            return pl.reciprocal(1.0 + jnp.exp(-v), approx=True)
        return jax.nn.sigmoid(v)

    whh = whh_ref[...]                                  # loaded once
    h = jnp.zeros((1, H), jnp.float32)
    c = jnp.zeros((1, H), jnp.float32)
    hist_rows = []

    # Fully static unroll (T is small and known): all slices are static and
    # the h/c carries plus the hidden-state history stay register-resident.
    for t in range(T):
        # Only the unavoidable recurrent matmul stays inside the time loop.
        gates = pg[t:t + 1, :] + jnp.dot(h.astype(mxu_dtype), whh,
                                         preferred_element_type=jnp.float32)
        # H is a multiple of 128 here, so these slices stay lane-aligned.
        i_g = sigmoid(gates[:, 0 * H:1 * H])
        f_g = sigmoid(gates[:, 1 * H:2 * H])
        g_g = jnp.tanh(gates[:, 2 * H:3 * H])
        o_g = sigmoid(gates[:, 3 * H:4 * H])
        c = f_g * c + i_g * g_g
        h = o_g * jnp.tanh(c)
        hist_rows.append(h)

    # History assembled in registers, written back only through the FC result.
    hist = jnp.concatenate(hist_rows, axis=0)           # (T, H) value
    out_ref[...] = (jnp.dot(hist.astype(mxu_dtype), wfc_ref[...],
                            preferred_element_type=jnp.float32)
                    + bfc_ref[...]).astype(out_ref.dtype)


def lstm_model_forward(x, wih_t, whh_t, b, wfc_t, bfc, *,
                       param_dtype=jnp.float32, approx_sigmoid=True):
    """Runs the LSTMModel forward.

    `param_dtype=jnp.bfloat16` casts the matmul operands (x and all weight
    matrices) for the bf16 MXU -- valid on v5e, v6e and v7x.  Accumulation,
    biases, gate math and the h/c carries remain f32.  Note the bf16 path
    re-casts h to bf16 every timestep, so rounding compounds over T; for long
    sequences prefer param_dtype=f32.
    """
    T, B, D = x.shape
    H = whh_t.shape[0]
    O = wfc_t.shape[1]

    # The original PyTorch forward constructs h0/c0 with x.size(0) as the
    # batch dim; it is only well-defined when seq_len == batch.
    assert T == B, "LSTMModel forward requires seq_len == batch (h0 shape quirk)"

    # `out[:, -1, :]` selects the hidden state of the LAST batch element at
    # every timestep; with zero initial state the rows are independent, so
    # only batch row B-1 is needed (bit-identical, simpler -- not a speedup).
    x_sel = x[:, B - 1, :].astype(param_dtype)          # (T, D)

    # Lane-dense FC output: pad O up to a multiple of 128 so the single output
    # store is an unmasked vst; slice back afterwards.
    O_pad = max(128, ((O + 127) // 128) * 128)
    wfc_pad = jnp.zeros((H, O_pad), dtype=param_dtype).at[:, :O].set(
        wfc_t.astype(param_dtype))
    bfc_pad = jnp.zeros((1, O_pad), dtype=jnp.float32).at[:, :O].set(
        bfc.astype(jnp.float32))

    kernel = functools.partial(_lstm_kernel, hidden_dim=H, seq_len=T,
                               approx_sigmoid=approx_sigmoid)
    vmem = pltpu.MemorySpace.VMEM

    out = pl.pallas_call(
        kernel,
        out_shape=jax.ShapeDtypeStruct((T, O_pad), jnp.float32),
        in_specs=[pl.BlockSpec(memory_space=vmem)] * 6,
        out_specs=pl.BlockSpec(memory_space=vmem),
    )(x_sel,
      wih_t.astype(param_dtype),
      whh_t.astype(param_dtype),
      b.astype(jnp.float32),
      wfc_pad,
      bfc_pad)
    return out[:, :O]                                   # (T, O)


def lstm_model_reference(x, wih_t, whh_t, b, wfc_t, bfc):
    """Pure-JAX reference mirroring the PyTorch forward (full batch)."""
    T, B, D = x.shape
    H = whh_t.shape[0]

    def step(carry, x_t):
        h, c = carry
        gates = x_t @ wih_t + h @ whh_t + b[0]
        i_g = jax.nn.sigmoid(gates[:, 0 * H:1 * H])
        f_g = jax.nn.sigmoid(gates[:, 1 * H:2 * H])
        g_g = jnp.tanh(gates[:, 2 * H:3 * H])
        o_g = jax.nn.sigmoid(gates[:, 3 * H:4 * H])
        c = f_g * c + i_g * g_g
        h = o_g * jnp.tanh(c)
        return (h, c), h

    init = (jnp.zeros((B, H), jnp.float32), jnp.zeros((B, H), jnp.float32))
    _, hs = jax.lax.scan(step, init, x)        # hs: (T, B, H)
    return hs[:, B - 1, :] @ wfc_t + bfc[0]    # (T, O)


if __name__ == "__main__":
    # Small shapes consistent with the module (hidden scaled down from 500 to
    # a lane-aligned 128; the original forward's h0 quirk requires T == B).
    input_dim = 13
    hidden_dim = 128
    output_dim = 48
    T = 8   # seq_len
    B = 8   # batch (must equal T for the original forward to be valid)

    key = jax.random.PRNGKey(0)
    ks = jax.random.split(key, 8)
    s = 1.0 / np.sqrt(hidden_dim)   # PyTorch LSTM/Linear init range

    x = jax.random.normal(ks[0], (T, B, input_dim), dtype=jnp.float32)
    wih_t = jax.random.uniform(ks[1], (input_dim, 4 * hidden_dim),
                               minval=-s, maxval=s, dtype=jnp.float32)
    whh_t = jax.random.uniform(ks[2], (hidden_dim, 4 * hidden_dim),
                               minval=-s, maxval=s, dtype=jnp.float32)
    b_ih = jax.random.uniform(ks[3], (1, 4 * hidden_dim),
                              minval=-s, maxval=s, dtype=jnp.float32)
    b_hh = jax.random.uniform(ks[4], (1, 4 * hidden_dim),
                              minval=-s, maxval=s, dtype=jnp.float32)
    b = b_ih + b_hh
    wfc_t = jax.random.uniform(ks[5], (hidden_dim, output_dim),
                               minval=-s, maxval=s, dtype=jnp.float32)
    bfc = jax.random.uniform(ks[6], (1, output_dim),
                             minval=-s, maxval=s, dtype=jnp.float32)

    ref = jax.block_until_ready(
        lstm_model_reference(x, wih_t, whh_t, b, wfc_t, bfc))

    # Exact-sigmoid f32 path: tight match against the pure-JAX reference.
    out_exact = jax.block_until_ready(
        lstm_model_forward(x, wih_t, whh_t, b, wfc_t, bfc,
                           approx_sigmoid=False))
    assert out_exact.shape == (T, output_dim)
    np.testing.assert_allclose(np.asarray(out_exact), np.asarray(ref),
                               rtol=1e-4, atol=1e-4)

    # Default path: f32 operands + EUP approx-reciprocal sigmoid.
    out = jax.block_until_ready(
        lstm_model_forward(x, wih_t, whh_t, b, wfc_t, bfc))
    assert out.shape == (T, output_dim)
    np.testing.assert_allclose(np.asarray(out), np.asarray(ref),
                               rtol=3e-3, atol=3e-3)

    # bf16 matmul-operand path (valid on all generations); gate math and the
    # h/c carries stay f32.
    out_bf16 = jax.block_until_ready(
        lstm_model_forward(x, wih_t, whh_t, b, wfc_t, bfc,
                           param_dtype=jnp.bfloat16))
    assert out_bf16.shape == (T, output_dim)
    assert bool(jnp.all(jnp.isfinite(out_bf16)))
    np.testing.assert_allclose(np.asarray(out_bf16), np.asarray(ref),
                               rtol=1e-1, atol=1e-1)

    print("KERNEL_OK")
</pallas_src>

<mosaic_0001>
module attributes {stable_mosaic.version = 11 : i64} {
  func.func @_lstm_kernel(%arg0: memref<8x13xf32, #tpu.memory_space<vmem>>, %arg1: memref<13x512xf32, #tpu.memory_space<vmem>>, %arg2: memref<128x512xf32, #tpu.memory_space<vmem>>, %arg3: memref<1x512xf32, #tpu.memory_space<vmem>>, %arg4: memref<128x128xf32, #tpu.memory_space<vmem>>, %arg5: memref<1x128xf32, #tpu.memory_space<vmem>>, %arg6: memref<8x128xf32, #tpu.memory_space<vmem>>) attributes {dimension_semantics = [], scalar_prefetch = 0 : i64, scratch_operands = 0 : i64, tpu.core_type = #tpu.core_type<tc>} {
    %c0 = arith.constant 0 : index
    %c0_0 = arith.constant 0 : index
    %0 = vector.load %arg0[%c0, %c0_0] : memref<8x13xf32, #tpu.memory_space<vmem>>, vector<8x13xf32>
    %c0_1 = arith.constant 0 : index
    %c0_2 = arith.constant 0 : index
    %1 = vector.load %arg1[%c0_1, %c0_2] : memref<13x512xf32, #tpu.memory_space<vmem>>, vector<13x512xf32>
    %cst = arith.constant dense<0.000000e+00> : vector<8x512xf32>
    %2 = tpu.matmul %0, %1, %cst {dimension_numbers = #tpu.dot_dimension_numbers<[1], [0], [0], [1], [0, 0, 1, 1], [], []>} : vector<8x13xf32>, vector<13x512xf32>, vector<8x512xf32> -> vector<8x512xf32>
    %c0_3 = arith.constant 0 : index
    %c0_4 = arith.constant 0 : index
    %3 = vector.load %arg3[%c0_3, %c0_4] : memref<1x512xf32, #tpu.memory_space<vmem>>, vector<1x512xf32>
    %4 = vector.broadcast %3 : vector<1x512xf32> to vector<8x512xf32>
    %5 = arith.addf %2, %4 : vector<8x512xf32>
    %c0_5 = arith.constant 0 : index
    %c0_6 = arith.constant 0 : index
    %6 = vector.load %arg2[%c0_5, %c0_6] : memref<128x512xf32, #tpu.memory_space<vmem>>, vector<128x512xf32>
    %cst_7 = arith.constant 0.000000e+00 : f32
    %7 = vector.broadcast %cst_7 : f32 to vector<1x128xf32>
    %cst_8 = arith.constant 0.000000e+00 : f32
    %8 = vector.broadcast %cst_8 : f32 to vector<1x128xf32>
    %9 = vector.extract_strided_slice %5 {offsets = [0, 0], sizes = [1, 512], strides = [1, 1]} : vector<8x512xf32> to vector<1x512xf32>
    %cst_9 = arith.constant dense<0.000000e+00> : vector<1x512xf32>
    %10 = tpu.matmul %7, %6, %cst_9 {dimension_numbers = #tpu.dot_dimension_numbers<[1], [0], [0], [1], [0, 0, 1, 1], [], []>} : vector<1x128xf32>, vector<128x512xf32>, vector<1x512xf32> -> vector<1x512xf32>
    %11 = arith.addf %9, %10 : vector<1x512xf32>
    %12 = vector.extract_strided_slice %11 {offsets = [0, 0], sizes = [1, 128], strides = [1, 1]} : vector<1x512xf32> to vector<1x128xf32>
    %13 = arith.negf %12 : vector<1x128xf32>
    %14 = math.exp %13 : vector<1x128xf32>
    %cst_10 = arith.constant 1.000000e+00 : f32
    %15 = vector.broadcast %cst_10 : f32 to vector<1x128xf32>
    %16 = arith.addf %15, %14 : vector<1x128xf32>
    %17 = arith.divf %15, %16 : vector<1x128xf32>
    %18 = vector.extract_strided_slice %11 {offsets = [0, 128], sizes = [1, 128], strides = [1, 1]} : vector<1x512xf32> to vector<1x128xf32>
    %19 = arith.negf %18 : vector<1x128xf32>
    %20 = math.exp %19 : vector<1x128xf32>
    %cst_11 = arith.constant 1.000000e+00 : f32
    %21 = vector.broadcast %cst_11 : f32 to vector<1x128xf32>
    %22 = arith.addf %21, %20 : vector<1x128xf32>
    %23 = arith.divf %21, %22 : vector<1x128xf32>
    %24 = vector.extract_strided_slice %11 {offsets = [0, 256], sizes = [1, 128], strides = [1, 1]} : vector<1x512xf32> to vector<1x128xf32>
    %25 = math.tanh %24 : vector<1x128xf32>
    %26 = vector.extract_strided_slice %11 {offsets = [0, 384], sizes = [1, 128], strides = [1, 1]} : vector<1x512xf32> to vector<1x128xf32>
    %27 = arith.negf %26 : vector<1x128xf32>
    %28 = math.exp %27 : vector<1x128xf32>
    %cst_12 = arith.constant 1.000000e+00 : f32
    %29 = vector.broadcast %cst_12 : f32 to vector<1x128xf32>
    %30 = arith.addf %29, %28 : vector<1x128xf32>
    %31 = arith.divf %29, %30 : vector<1x128xf32>
    %32 = arith.mulf %23, %8 : vector<1x128xf32>
    %33 = arith.mulf %17, %25 : vector<1x128xf32>
    %34 = arith.addf %32, %33 : vector<1x128xf32>
    %35 = math.tanh %34 : vector<1x128xf32>
    %36 = arith.mulf %31, %35 : vector<1x128xf32>
    %37 = vector.extract_strided_slice %5 {offsets = [1, 0], sizes = [1, 512], strides = [1, 1]} : vector<8x512xf32> to vector<1x512xf32>
    %cst_13 = arith.constant dense<0.000000e+00> : vector<1x512xf32>
    %38 = tpu.matmul %36, %6, %cst_13 {dimension_numbers = #tpu.dot_dimension_numbers<[1], [0], [0], [1], [0, 0, 1, 1], [], []>} : vector<1x128xf32>, vector<128x512xf32>, vector<1x512xf32> -> vector<1x512xf32>
    %39 = arith.addf %37, %38 : vector<1x512xf32>
    %40 = vector.extract_strided_slice %39 {offsets = [0, 0], sizes = [1, 128], strides = [1, 1]} : vector<1x512xf32> to vector<1x128xf32>
    %41 = arith.negf %40 : vector<1x128xf32>
    %42 = math.exp %41 : vector<1x128xf32>
    %cst_14 = arith.constant 1.000000e+00 : f32
    %43 = vector.broadcast %cst_14 : f32 to vector<1x128xf32>
    %44 = arith.addf %43, %42 : vector<1x128xf32>
    %45 = arith.divf %43, %44 : vector<1x128xf32>
    %46 = vector.extract_strided_slice %39 {offsets = [0, 128], sizes = [1, 128], strides = [1, 1]} : vector<1x512xf32> to vector<1x128xf32>
    %47 = arith.negf %46 : vector<1x128xf32>
    %48 = math.exp %47 : vector<1x128xf32>
    %cst_15 = arith.constant 1.000000e+00 : f32
    %49 = vector.broadcast %cst_15 : f32 to vector<1x128xf32>
    %50 = arith.addf %49, %48 : vector<1x128xf32>
    %51 = arith.divf %49, %50 : vector<1x128xf32>
    %52 = vector.extract_strided_slice %39 {offsets = [0, 256], sizes = [1, 128], strides = [1, 1]} : vector<1x512xf32> to vector<1x128xf32>
    %53 = math.tanh %52 : vector<1x128xf32>
    %54 = vector.extract_strided_slice %39 {offsets = [0, 384], sizes = [1, 128], strides = [1, 1]} : vector<1x512xf32> to vector<1x128xf32>
    %55 = arith.negf %54 : vector<1x128xf32>
    %56 = math.exp %55 : vector<1x128xf32>
    %cst_16 = arith.constant 1.000000e+00 : f32
    %57 = vector.broadcast %cst_16 : f32 to vector<1x128xf32>
    %58 = arith.addf %57, %56 : vector<1x128xf32>
    %59 = arith.divf %57, %58 : vector<1x128xf32>
    %60 = arith.mulf %51, %34 : vector<1x128xf32>
    %61 = arith.mulf %45, %53 : vector<1x128xf32>
    %62 = arith.addf %60, %61 : vector<1x128xf32>
    %63 = math.tanh %62 : vector<1x128xf32>
    %64 = arith.mulf %59, %63 : vector<1x128xf32>
    %65 = vector.extract_strided_slice %5 {offsets = [2, 0], sizes = [1, 512], strides = [1, 1]} : vector<8x512xf32> to vector<1x512xf32>
    %cst_17 = arith.constant dense<0.000000e+00> : vector<1x512xf32>
    %66 = tpu.matmul %64, %6, %cst_17 {dimension_numbers = #tpu.dot_dimension_numbers<[1], [0], [0], [1], [0, 0, 1, 1], [], []>} : vector<1x128xf32>, vector<128x512xf32>, vector<1x512xf32> -> vector<1x512xf32>
    %67 = arith.addf %65, %66 : vector<1x512xf32>
    %68 = vector.extract_strided_slice %67 {offsets = [0, 0], sizes = [1, 128], strides = [1, 1]} : vector<1x512xf32> to vector<1x128xf32>
    %69 = arith.negf %68 : vector<1x128xf32>
    %70 = math.exp %69 : vector<1x128xf32>
    %cst_18 = arith.constant 1.000000e+00 : f32
    %71 = vector.broadcast %cst_18 : f32 to vector<1x128xf32>
    %72 = arith.addf %71, %70 : vector<1x128xf32>
    %73 = arith.divf %71, %72 : vector<1x128xf32>
    %74 = vector.extract_strided_slice %67 {offsets = [0, 128], sizes = [1, 128], strides = [1, 1]} : vector<1x512xf32> to vector<1x128xf32>
    %75 = arith.negf %74 : vector<1x128xf32>
    %76 = math.exp %75 : vector<1x128xf32>
    %cst_19 = arith.constant 1.000000e+00 : f32
    %77 = vector.broadcast %cst_19 : f32 to vector<1x128xf32>
    %78 = arith.addf %77, %76 : vector<1x128xf32>
    %79 = arith.divf %77, %78 : vector<1x128xf32>
    %80 = vector.extract_strided_slice %67 {offsets = [0, 256], sizes = [1, 128], strides = [1, 1]} : vector<1x512xf32> to vector<1x128xf32>
    %81 = math.tanh %80 : vector<1x128xf32>
    %82 = vector.extract_strided_slice %67 {offsets = [0, 384], sizes = [1, 128], strides = [1, 1]} : vector<1x512xf32> to vector<1x128xf32>
    %83 = arith.negf %82 : vector<1x128xf32>
    %84 = math.exp %83 : vector<1x128xf32>
    %cst_20 = arith.constant 1.000000e+00 : f32
    %85 = vector.broadcast %cst_20 : f32 to vector<1x128xf32>
    %86 = arith.addf %85, %84 : vector<1x128xf32>
    %87 = arith.divf %85, %86 : vector<1x128xf32>
    %88 = arith.mulf %79, %62 : vector<1x128xf32>
    %89 = arith.mulf %73, %81 : vector<1x128xf32>
    %90 = arith.addf %88, %89 : vector<1x128xf32>
    %91 = math.tanh %90 : vector<1x128xf32>
    %92 = arith.mulf %87, %91 : vector<1x128xf32>
    %93 = vector.extract_strided_slice %5 {offsets = [3, 0], sizes = [1, 512], strides = [1, 1]} : vector<8x512xf32> to vector<1x512xf32>
    %cst_21 = arith.constant dense<0.000000e+00> : vector<1x512xf32>
    %94 = tpu.matmul %92, %6, %cst_21 {dimension_numbers = #tpu.dot_dimension_numbers<[1], [0], [0], [1], [0, 0, 1, 1], [], []>} : vector<1x128xf32>, vector<128x512xf32>, vector<1x512xf32> -> vector<1x512xf32>
    %95 = arith.addf %93, %94 : vector<1x512xf32>
    %96 = vector.extract_strided_slice %95 {offsets = [0, 0], sizes = [1, 128], strides = [1, 1]} : vector<1x512xf32> to vector<1x128xf32>
    %97 = arith.negf %96 : vector<1x128xf32>
    %98 = math.exp %97 : vector<1x128xf32>
    %cst_22 = arith.constant 1.000000e+00 : f32
    %99 = vector.broadcast %cst_22 : f32 to vector<1x128xf32>
    %100 = arith.addf %99, %98 : vector<1x128xf32>
    %101 = arith.divf %99, %100 : vector<1x128xf32>
    %102 = vector.extract_strided_slice %95 {offsets = [0, 128], sizes = [1, 128], strides = [1, 1]} : vector<1x512xf32> to vector<1x128xf32>
    %103 = arith.negf %102 : vector<1x128xf32>
    %104 = math.exp %103 : vector<1x128xf32>
    %cst_23 = arith.constant 1.000000e+00 : f32
    %105 = vector.broadcast %cst_23 : f32 to vector<1x128xf32>
    %106 = arith.addf %105, %104 : vector<1x128xf32>
    %107 = arith.divf %105, %106 : vector<1x128xf32>
    %108 = vector.extract_strided_slice %95 {offsets = [0, 256], sizes = [1, 128], strides = [1, 1]} : vector<1x512xf32> to vector<1x128xf32>
    %109 = math.tanh %108 : vector<1x128xf32>
    %110 = vector.extract_strided_slice %95 {offsets = [0, 384], sizes = [1, 128], strides = [1, 1]} : vector<1x512xf32> to vector<1x128xf32>
    %111 = arith.negf %110 : vector<1x128xf32>
    %112 = math.exp %111 : vector<1x128xf32>
    %cst_24 = arith.constant 1.000000e+00 : f32
    %113 = vector.broadcast %cst_24 : f32 to vector<1x128xf32>
    %114 = arith.addf %113, %112 : vector<1x128xf32>
    %115 = arith.divf %113, %114 : vector<1x128xf32>
    %116 = arith.mulf %107, %90 : vector<1x128xf32>
    %117 = arith.mulf %101, %109 : vector<1x128xf32>
    %118 = arith.addf %116, %117 : vector<1x128xf32>
    %119 = math.tanh %118 : vector<1x128xf32>
    %120 = arith.mulf %115, %119 : vector<1x128xf32>
    %121 = vector.extract_strided_slice %5 {offsets = [4, 0], sizes = [1, 512], strides = [1, 1]} : vector<8x512xf32> to vector<1x512xf32>
    %cst_25 = arith.constant dense<0.000000e+00> : vector<1x512xf32>
    %122 = tpu.matmul %120, %6, %cst_25 {dimension_numbers = #tpu.dot_dimension_numbers<[1], [0], [0], [1], [0, 0, 1, 1], [], []>} : vector<1x128xf32>, vector<128x512xf32>, vector<1x512xf32> -> vector<1x512xf32>
    %123 = arith.addf %121, %122 : vector<1x512xf32>
    %124 = vector.extract_strided_slice %123 {offsets = [0, 0], sizes = [1, 128], strides = [1, 1]} : vector<1x512xf32> to vector<1x128xf32>
    %125 = arith.negf %124 : vector<1x128xf32>
    %126 = math.exp %125 : vector<1x128xf32>
    %cst_26 = arith.constant 1.000000e+00 : f32
    %127 = vector.broadcast %cst_26 : f32 to vector<1x128xf32>
    %128 = arith.addf %127, %126 : vector<1x128xf32>
    %129 = arith.divf %127, %128 : vector<1x128xf32>
    %130 = vector.extract_strided_slice %123 {offsets = [0, 128], sizes = [1, 128], strides = [1, 1]} : vector<1x512xf32> to vector<1x128xf32>
    %131 = arith.negf %130 : vector<1x128xf32>
    %132 = math.exp %131 : vector<1x128xf32>
    %cst_27 = arith.constant 1.000000e+00 : f32
    %133 = vector.broadcast %cst_27 : f32 to vector<1x128xf32>
    %134 = arith.addf %133, %132 : vector<1x128xf32>
    %135 = arith.divf %133, %134 : vector<1x128xf32>
    %136 = vector.extract_strided_slice %123 {offsets = [0, 256], sizes = [1, 128], strides = [1, 1]} : vector<1x512xf32> to vector<1x128xf32>
    %137 = math.tanh %136 : vector<1x128xf32>
    %138 = vector.extract_strided_slice %123 {offsets = [0, 384], sizes = [1, 128], strides = [1, 1]} : vector<1x512xf32> to vector<1x128xf32>
    %139 = arith.negf %138 : vector<1x128xf32>
    %140 = math.exp %139 : vector<1x128xf32>
    %cst_28 = arith.constant 1.000000e+00 : f32
    %141 = vector.broadcast %cst_28 : f32 to vector<1x128xf32>
    %142 = arith.addf %141, %140 : vector<1x128xf32>
    %143 = arith.divf %141, %142 : vector<1x128xf32>
    %144 = arith.mulf %135, %118 : vector<1x128xf32>
    %145 = arith.mulf %129, %137 : vector<1x128xf32>
    %146 = arith.addf %144, %145 : vector<1x128xf32>
    %147 = math.tanh %146 : vector<1x128xf32>
    %148 = arith.mulf %143, %147 : vector<1x128xf32>
    %149 = vector.extract_strided_slice %5 {offsets = [5, 0], sizes = [1, 512], strides = [1, 1]} : vector<8x512xf32> to vector<1x512xf32>
    %cst_29 = arith.constant dense<0.000000e+00> : vector<1x512xf32>
    %150 = tpu.matmul %148, %6, %cst_29 {dimension_numbers = #tpu.dot_dimension_numbers<[1], [0], [0], [1], [0, 0, 1, 1], [], []>} : vector<1x128xf32>, vector<128x512xf32>, vector<1x512xf32> -> vector<1x512xf32>
    %151 = arith.addf %149, %150 : vector<1x512xf32>
    %152 = vector.extract_strided_slice %151 {offsets = [0, 0], sizes = [1, 128], strides = [1, 1]} : vector<1x512xf32> to vector<1x128xf32>
    %153 = arith.negf %152 : vector<1x128xf32>
    %154 = math.exp %153 : vector<1x128xf32>
    %cst_30 = arith.constant 1.000000e+00 : f32
    %155 = vector.broadcast %cst_30 : f32 to vector<1x128xf32>
    %156 = arith.addf %155, %154 : vector<1x128xf32>
    %157 = arith.divf %155, %156 : vector<1x128xf32>
    %158 = vector.extract_strided_slice %151 {offsets = [0, 128], sizes = [1, 128], strides = [1, 1]} : vector<1x512xf32> to vector<1x128xf32>
    %159 = arith.negf %158 : vector<1x128xf32>
    %160 = math.exp %159 : vector<1x128xf32>
    %cst_31 = arith.constant 1.000000e+00 : f32
    %161 = vector.broadcast %cst_31 : f32 to vector<1x128xf32>
    %162 = arith.addf %161, %160 : vector<1x128xf32>
    %163 = arith.divf %161, %162 : vector<1x128xf32>
    %164 = vector.extract_strided_slice %151 {offsets = [0, 256], sizes = [1, 128], strides = [1, 1]} : vector<1x512xf32> to vector<1x128xf32>
    %165 = math.tanh %164 : vector<1x128xf32>
    %166 = vector.extract_strided_slice %151 {offsets = [0, 384], sizes = [1, 128], strides = [1, 1]} : vector<1x512xf32> to vector<1x128xf32>
    %167 = arith.negf %166 : vector<1x128xf32>
    %168 = math.exp %167 : vector<1x128xf32>
    %cst_32 = arith.constant 1.000000e+00 : f32
    %169 = vector.broadcast %cst_32 : f32 to vector<1x128xf32>
    %170 = arith.addf %169, %168 : vector<1x128xf32>
    %171 = arith.divf %169, %170 : vector<1x128xf32>
    %172 = arith.mulf %163, %146 : vector<1x128xf32>
    %173 = arith.mulf %157, %165 : vector<1x128xf32>
    %174 = arith.addf %172, %173 : vector<1x128xf32>
    %175 = math.tanh %174 : vector<1x128xf32>
    %176 = arith.mulf %171, %175 : vector<1x128xf32>
    %177 = vector.extract_strided_slice %5 {offsets = [6, 0], sizes = [1, 512], strides = [1, 1]} : vector<8x512xf32> to vector<1x512xf32>
    %cst_33 = arith.constant dense<0.000000e+00> : vector<1x512xf32>
    %178 = tpu.matmul %176, %6, %cst_33 {dimension_numbers = #tpu.dot_dimension_numbers<[1], [0], [0], [1], [0, 0, 1, 1], [], []>} : vector<1x128xf32>, vector<128x512xf32>, vector<1x512xf32> -> vector<1x512xf32>
    %179 = arith.addf %177, %178 : vector<1x512xf32>
    %180 = vector.extract_strided_slice %179 {offsets = [0, 0], sizes = [1, 128], strides = [1, 1]} : vector<1x512xf32> to vector<1x128xf32>
    %181 = arith.negf %180 : vector<1x128xf32>
    %182 = math.exp %181 : vector<1x128xf32>
    %cst_34 = arith.constant 1.000000e+00 : f32
    %183 = vector.broadcast %cst_34 : f32 to vector<1x128xf32>
    %184 = arith.addf %183, %182 : vector<1x128xf32>
    %185 = arith.divf %183, %184 : vector<1x128xf32>
    %186 = vector.extract_strided_slice %179 {offsets = [0, 128], sizes = [1, 128], strides = [1, 1]} : vector<1x512xf32> to vector<1x128xf32>
    %187 = arith.negf %186 : vector<1x128xf32>
    %188 = math.exp %187 : vector<1x128xf32>
    %cst_35 = arith.constant 1.000000e+00 : f32
    %189 = vector.broadcast %cst_35 : f32 to vector<1x128xf32>
    %190 = arith.addf %189, %188 : vector<1x128xf32>
    %191 = arith.divf %189, %190 : vector<1x128xf32>
    %192 = vector.extract_strided_slice %179 {offsets = [0, 256], sizes = [1, 128], strides = [1, 1]} : vector<1x512xf32> to vector<1x128xf32>
    %193 = math.tanh %192 : vector<1x128xf32>
    %194 = vector.extract_strided_slice %179 {offsets = [0, 384], sizes = [1, 128], strides = [1, 1]} : vector<1x512xf32> to vector<1x128xf32>
    %195 = arith.negf %194 : vector<1x128xf32>
    %196 = math.exp %195 : vector<1x128xf32>
    %cst_36 = arith.constant 1.000000e+00 : f32
    %197 = vector.broadcast %cst_36 : f32 to vector<1x128xf32>
    %198 = arith.addf %197, %196 : vector<1x128xf32>
    %199 = arith.divf %197, %198 : vector<1x128xf32>
    %200 = arith.mulf %191, %174 : vector<1x128xf32>
    %201 = arith.mulf %185, %193 : vector<1x128xf32>
    %202 = arith.addf %200, %201 : vector<1x128xf32>
    %203 = math.tanh %202 : vector<1x128xf32>
    %204 = arith.mulf %199, %203 : vector<1x128xf32>
    %205 = vector.extract_strided_slice %5 {offsets = [7, 0], sizes = [1, 512], strides = [1, 1]} : vector<8x512xf32> to vector<1x512xf32>
    %cst_37 = arith.constant dense<0.000000e+00> : vector<1x512xf32>
    %206 = tpu.matmul %204, %6, %cst_37 {dimension_numbers = #tpu.dot_dimension_numbers<[1], [0], [0], [1], [0, 0, 1, 1], [], []>} : vector<1x128xf32>, vector<128x512xf32>, vector<1x512xf32> -> vector<1x512xf32>
    %207 = arith.addf %205, %206 : vector<1x512xf32>
    %208 = vector.extract_strided_slice %207 {offsets = [0, 0], sizes = [1, 128], strides = [1, 1]} : vector<1x512xf32> to vector<1x128xf32>
    %209 = arith.negf %208 : vector<1x128xf32>
    %210 = math.exp %209 : vector<1x128xf32>
    %cst_38 = arith.constant 1.000000e+00 : f32
    %211 = vector.broadcast %cst_38 : f32 to vector<1x128xf32>
    %212 = arith.addf %211, %210 : vector<1x128xf32>
    %213 = arith.divf %211, %212 : vector<1x128xf32>
    %214 = vector.extract_strided_slice %207 {offsets = [0, 128], sizes = [1, 128], strides = [1, 1]} : vector<1x512xf32> to vector<1x128xf32>
    %215 = arith.negf %214 : vector<1x128xf32>
    %216 = math.exp %215 : vector<1x128xf32>
    %cst_39 = arith.constant 1.000000e+00 : f32
    %217 = vector.broadcast %cst_39 : f32 to vector<1x128xf32>
    %218 = arith.addf %217, %216 : vector<1x128xf32>
    %219 = arith.divf %217, %218 : vector<1x128xf32>
    %220 = vector.extract_strided_slice %207 {offsets = [0, 256], sizes = [1, 128], strides = [1, 1]} : vector<1x512xf32> to vector<1x128xf32>
    %221 = math.tanh %220 : vector<1x128xf32>
    %222 = vector.extract_strided_slice %207 {offsets = [0, 384], sizes = [1, 128], strides = [1, 1]} : vector<1x512xf32> to vector<1x128xf32>
    %223 = arith.negf %222 : vector<1x128xf32>
    %224 = math.exp %223 : vector<1x128xf32>
    %cst_40 = arith.constant 1.000000e+00 : f32
    %225 = vector.broadcast %cst_40 : f32 to vector<1x128xf32>
    %226 = arith.addf %225, %224 : vector<1x128xf32>
    %227 = arith.divf %225, %226 : vector<1x128xf32>
    %228 = arith.mulf %219, %202 : vector<1x128xf32>
    %229 = arith.mulf %213, %221 : vector<1x128xf32>
    %230 = arith.addf %228, %229 : vector<1x128xf32>
    %231 = math.tanh %230 : vector<1x128xf32>
    %232 = arith.mulf %227, %231 : vector<1x128xf32>
    %233 = tpu.concatenate %36, %64, %92, %120, %148, %176, %204, %232 in 0 : vector<1x128xf32>, vector<1x128xf32>, vector<1x128xf32>, vector<1x128xf32>, vector<1x128xf32>, vector<1x128xf32>, vector<1x128xf32>, vector<1x128xf32> -> vector<8x128xf32>
    %c0_41 = arith.constant 0 : index
    %c0_42 = arith.constant 0 : index
    %234 = vector.load %arg4[%c0_41, %c0_42] : memref<128x128xf32, #tpu.memory_space<vmem>>, vector<128x128xf32>
    %cst_43 = arith.constant dense<0.000000e+00> : vector<8x128xf32>
    %235 = tpu.matmul %233, %234, %cst_43 {dimension_numbers = #tpu.dot_dimension_numbers<[1], [0], [0], [1], [0, 0, 1, 1], [], []>} : vector<8x128xf32>, vector<128x128xf32>, vector<8x128xf32> -> vector<8x128xf32>
    %c0_44 = arith.constant 0 : index
    %c0_45 = arith.constant 0 : index
    %236 = vector.load %arg5[%c0_44, %c0_45] : memref<1x128xf32, #tpu.memory_space<vmem>>, vector<1x128xf32>
    %237 = vector.broadcast %236 : vector<1x128xf32> to vector<8x128xf32>
    %238 = arith.addf %235, %237 : vector<8x128xf32>
    %c0_46 = arith.constant 0 : index
    %c0_47 = arith.constant 0 : index
    %239 = vector.load %arg6[%c0_46, %c0_47] : memref<8x128xf32, #tpu.memory_space<vmem>>, vector<8x128xf32>
    tpu.vector_store %arg6[%c0_46, %c0_47], %238 {strides = array<i32>} : memref<8x128xf32, #tpu.memory_space<vmem>>, vector<8x128xf32>,
    return
  }
}

</mosaic_0001>

<llo_original>
// kernel: tpu_custom_call.1
$region0: #{tpu_custom_call.1}
  #allocation0 [shape = 'u32[]', space=smem, size = 0x4, offset = 0x4, fixed_abs, tag = 'smem constant byte address 0x4 - core index']
  #allocation1 [shape = 'u32[144,128]{1,0:T(1,128)}', space=vmem, size = 0x12000, scoped, tag = 'internal scratch']
  %s0 = inlined_call_operand.hbm [shape: f32[8,13], index: 0, kind: input, shape index: {}]
  %s1 = inlined_call_operand.hbm [shape: f32[13,512], index: 1, kind: input, shape index: {}]
  %s2 = inlined_call_operand.hbm [shape: f32[128,512], index: 2, kind: input, shape index: {}]
  %s3 = inlined_call_operand.vmem [shape: f32[1,512], index: 3, kind: input, shape index: {}]
  %s4 = inlined_call_operand.hbm [shape: f32[128,128], index: 4, kind: input, shape index: {}]
  %s5 = inlined_call_operand.vmem [shape: f32[1,128], index: 5, kind: input, shape index: {}]
  %s6 = inlined_call_operand.hbm [shape: f32[8,128], index: 6, kind: output, shape index: {}]
  %s7 = sld [smem:[#allocation0]]
  $region50: #{tpu_custom_call.1} parent=0
    _
  %s9 = ssub.s32 1, %s7
  %s10 = scalar_select 0, %s9, %s7
  $region1: #{tpu_custom_call.1} parent=0
    #allocation2 [shape = 'u8[4096]{0}', space=vmem, size = 0x1000, scoped, tag = 'input window, operand 0, single buffered']
    #allocation3 [shape = 's32[1]{0}', space=sflag, size = 0x4, scoped, tag = 'scoped memory for tpu_custom_call.1']
    #allocation4 [shape = 's32[1]{0}', space=sflag, size = 0x4, scoped, tag = 'scoped memory for tpu_custom_call.1']
    #allocation5 [shape = 'u8[32768]{0}', space=vmem, size = 0x8000, scoped, tag = 'input window, operand 1, single buffered']
    #allocation6 [shape = 's32[1]{0}', space=sflag, size = 0x4, scoped, tag = 'scoped memory for tpu_custom_call.1']
    #allocation7 [shape = 'u8[262144]{0}', space=vmem, size = 0x40000, scoped, tag = 'input window, operand 2, single buffered']
    #allocation8 [shape = 'u8[65536]{0}', space=vmem, size = 0x10000, scoped, tag = 'input window, operand 4, single buffered']
    #allocation9 [shape = 's32[1]{0}', space=sflag, size = 0x4, scoped, tag = 'scoped memory for tpu_custom_call.1']
    #allocation10 [shape = 'u8[4096]{0}', space=vmem, size = 0x1000, scoped, tag = 'output window, operand 0, single buffered']
    %11 = vsyncpa [#allocation3], 0
    %12 = vsyncpa [#allocation6], 0
    %13 = vsyncpa [#allocation9], 0
    %14 = vsyncpa [#allocation4], 0
    // Predicated region
    $region2: #{tpu_custom_call.1} parent=1 // pred_check
      _
    $region3: #{tpu_custom_call.1} parent=1 // pred_check_branch
      %16 = sbr.rel (0) target = $region5
    $region4: #{tpu_custom_call.1} parent=1 // pred_region
      %s18 = ssub.s32 128, 128
      %19 = vsyncadd [#allocation3], %s18
      %s21 = sshll.u32 [#allocation2], 4
      %s22 = int_to_ptr.vmem [resolvable:$true] %s21
      %24 = dma.hbm_to_vmem [thread:$0]  %s0, 128, %s22, [#allocation3]
    $region5: #{tpu_custom_call.1} parent=1 // pred_fallthru
      _
    // Predicated region
    $region6: #{tpu_custom_call.1} parent=1 // pred_check
      _
    $region7: #{tpu_custom_call.1} parent=1 // pred_check_branch
      %26 = sbr.rel (0) target = $region9
    $region8: #{tpu_custom_call.1} parent=1 // pred_region
      %s28 = ssub.s32 1024, 1024
      %29 = vsyncadd [#allocation6], %s28
      %s30 = sshll.u32 [#allocation5], 4
      %s31 = int_to_ptr.vmem [resolvable:$true] %s30
      %36 = dma.hbm_to_vmem [thread:$0]  %s1, 1024, %s31, [#allocation6], 512, 512, 32
    $region9: #{tpu_custom_call.1} parent=1 // pred_fallthru
      _
    // Predicated region
    $region10: #{tpu_custom_call.1} parent=1 // pred_check
      _
    $region11: #{tpu_custom_call.1} parent=1 // pred_check_branch
      %38 = sbr.rel (0) target = $region13
    $region12: #{tpu_custom_call.1} parent=1 // pred_region
      %s40 = ssub.s32 8192, 8192
      %41 = vsyncadd [#allocation6], %s40
      %s42 = sshll.u32 [#allocation7], 4
      %s43 = int_to_ptr.vmem [resolvable:$true] %s42
      %48 = dma.hbm_to_vmem [thread:$0]  %s2, 8192, %s43, [#allocation6], 512, 512, 32
    $region13: #{tpu_custom_call.1} parent=1 // pred_fallthru
      _
    // Predicated region
    $region14: #{tpu_custom_call.1} parent=1 // pred_check
      _
    $region15: #{tpu_custom_call.1} parent=1 // pred_check_branch
      %50 = sbr.rel (0) target = $region17
    $region16: #{tpu_custom_call.1} parent=1 // pred_region
      _
    $region17: #{tpu_custom_call.1} parent=1 // pred_fallthru
      _
    // Predicated region
    $region18: #{tpu_custom_call.1} parent=1 // pred_check
      _
    $region19: #{tpu_custom_call.1} parent=1 // pred_check_branch
      %52 = sbr.rel (0) target = $region21
    $region20: #{tpu_custom_call.1} parent=1 // pred_region
      %s54 = ssub.s32 2048, 2048
      %55 = vsyncadd [#allocation9], %s54
      %s56 = sshll.u32 [#allocation8], 4
      %s57 = int_to_ptr.vmem [resolvable:$true] %s56
      %62 = dma.hbm_to_vmem [thread:$0]  %s4, 2048, %s57, [#allocation9], 128, 128, 8
    $region21: #{tpu_custom_call.1} parent=1 // pred_fallthru
      _
    // Predicated region
    $region22: #{tpu_custom_call.1} parent=1 // pred_check
      _
    $region23: #{tpu_custom_call.1} parent=1 // pred_check_branch
      %64 = sbr.rel (0) target = $region25
    $region24: #{tpu_custom_call.1} parent=1 // pred_region
      _
    $region25: #{tpu_custom_call.1} parent=1 // pred_fallthru
      _
    // Predicated region
    $region26: #{tpu_custom_call.1} parent=1 // pred_check
      _
    $region27: #{tpu_custom_call.1} parent=1 // pred_check_branch
      %66 = sbr.rel (0) target = $region29
    $region28: #{tpu_custom_call.1} parent=1 // pred_region
      %67 = dma.done [#allocation3], 128
    $region29: #{tpu_custom_call.1} parent=1 // pred_fallthru
      _
    // Predicated region
    $region30: #{tpu_custom_call.1} parent=1 // pred_check
      _
    $region31: #{tpu_custom_call.1} parent=1 // pred_check_branch
      %69 = sbr.rel (0) target = $region33
    $region32: #{tpu_custom_call.1} parent=1 // pred_region
      %70 = dma.done [#allocation6], 1024
    $region33: #{tpu_custom_call.1} parent=1 // pred_fallthru
      _
    // Predicated region
    $region34: #{tpu_custom_call.1} parent=1 // pred_check
      _
    $region35: #{tpu_custom_call.1} parent=1 // pred_check_branch
      %72 = sbr.rel (0) target = $region37
    $region36: #{tpu_custom_call.1} parent=1 // pred_region
      %73 = dma.done [#allocation6], 8192
    $region37: #{tpu_custom_call.1} parent=1 // pred_fallthru
      _
    // Predicated region
    $region38: #{tpu_custom_call.1} parent=1 // pred_check
      _
    $region39: #{tpu_custom_call.1} parent=1 // pred_check_branch
      %75 = sbr.rel (0) target = $region41
    $region40: #{tpu_custom_call.1} parent=1 // pred_region
      %76 = dma.done [#allocation9], 2048
    $region41: #{tpu_custom_call.1} parent=1 // pred_fallthru
      _
    %v77 = vld [vmem:[#allocation2] sm:$0xff]
    %v78 = vld [vmem:[#allocation5] sm:$0xff]
    %v79 = vld [vmem:[#allocation5 + $0x8] sm:$0xff]
    %v80 = vld [vmem:[#allocation5 + $0x10] sm:$0xff]
    %v81 = vld [vmem:[#allocation5 + $0x18] sm:$0xff]
    %v82 = vld [vmem:[#allocation5 + $0x20] sm:$0x1f]
    %v83 = vld [vmem:[#allocation5 + $0x28] sm:$0x1f]
    %v84 = vld [vmem:[#allocation5 + $0x30] sm:$0x1f]
    %v85 = vld [vmem:[#allocation5 + $0x38] sm:$0x1f]
    %v86 = vld [vmem:[%s3] sm:$0xf]
    %v88 = vlaneseq
    %v89 = vshrl.u32 %v88, 7
    %v90 = vsub.s32 0, %v89
    %v91 = vrot.slane %v86, %v90
    %v92 = vlaneseq
    %v93 = vshrl.u32 %v92, 7
    %v94 = vsub.s32 1, %v93
    %v95 = vrot.slane %v86, %v94
    %v96 = vlaneseq
    %v97 = vshrl.u32 %v96, 7
    %v98 = vsub.s32 2, %v97
    %v99 = vrot.slane %v86, %v98
    %v100 = vlaneseq
    %v101 = vshrl.u32 %v100, 7
    %v102 = vsub.s32 3, %v101
    %v103 = vrot.slane %v86, %v102
    %vm108 = vcmask 105472
    %v110 = vsel %vm108, %v77, 0
    %vm112 = vcmask 1044480
    %v114 = vsel %vm112, %v82, 0
    %v117 = vsel %vm112, %v83, 0
    %v120 = vsel %vm112, %v84, 0
    %v123 = vsel %vm112, %v85, 0
    %125 = vmatprep.subr.mxu0 %v79
    %126 = vmatpush1.msra.mxu0 %v78
    %127 = vmatprep.subr.mxu0 %v117
    %128 = vmatpush1.msra.mxu0 %v114
    %129 = vmatprep.subr.mxu0 0.0
    %130 = vmatpush1.msra.mxu0 0.0
    %131 = vmatprep.subr.mxu0 0.0
    %132 = vmatpush1.msra.mxu0 0.0
    %133 = vmatprep.subr.mxu0 0.0
    %134 = vmatpush1.msra.mxu0 0.0
    %135 = vmatprep.subr.mxu0 0.0
    %136 = vmatpush1.msra.mxu0 0.0
    %137 = vmatprep.subr.mxu0 0.0
    %138 = vmatpush1.msra.mxu0 0.0
    %139 = vmatprep.subr.mxu0 0.0
    %140 = vmatpush1.msra.mxu0 0.0
    %141 = vmatprep.subr.mxu0 0.0
    %142 = vmatpush1.msra.mxu0 0.0
    %143 = vmatprep.subr.mxu0 0.0
    %144 = vmatpush1.msra.mxu0 0.0
    %145 = vmatprep.subr.mxu0 0.0
    %146 = vmatpush1.msra.mxu0 0.0
    %147 = vmatprep.subr.mxu0 0.0
    %148 = vmatpush1.msra.mxu0 0.0
    %149 = vmatprep.subr.mxu0 0.0
    %150 = vmatpush1.msra.mxu0 0.0
    %151 = vmatprep.subr.mxu0 0.0
    %152 = vmatpush1.msra.mxu0 0.0
    %153 = vmatprep.subr.mxu0 0.0
    %154 = vmatpush1.msra.mxu0 0.0
    %155 = vmatprep.subr.mxu0 0.0
    %156 = vmatpush1.msra.mxu0 0.0
    %157 = vmatprep.subr.mxu0 0.0
    %158 = vmatpush1.msra.mxu0 0.0
    %159 = vmatprep.subr.mxu0 0.0
    %160 = vmatpush1.msra.mxu0 0.0
    %161 = vmatprep.subr.mxu0 0.0
    %162 = vmatpush1.msra.mxu0 0.0
    %163 = vmatprep.subr.mxu0 0.0
    %164 = vmatpush1.msra.mxu0 0.0
    %165 = vmatprep.subr.mxu0 0.0
    %166 = vmatpush1.msra.mxu0 0.0
    %167 = vmatprep.subr.mxu0 0.0
    %168 = vmatpush1.msra.mxu0 0.0
    %169 = vmatprep.subr.mxu0 0.0
    %170 = vmatpush1.msra.mxu0 0.0
    %171 = vmatprep.subr.mxu0 0.0
    %172 = vmatpush1.msra.mxu0 0.0
    %173 = vmatprep.subr.mxu0 0.0
    %174 = vmatpush1.msra.mxu0 0.0
    %175 = vmatprep.subr.mxu0 0.0
    %176 = vmatpush1.msra.mxu0 0.0
    %177 = vmatprep.subr.mxu0 0.0
    %178 = vmatpush1.msra.mxu0 0.0
    %179 = vmatprep.subr.mxu0 0.0
    %180 = vmatpush1.msra.mxu0 0.0
    %181 = vmatprep.subr.mxu0 0.0
    %182 = vmatpush1.msra.mxu0 0.0
    %183 = vmatprep.subr.mxu0 0.0
    %184 = vmatpush1.msra.mxu0 0.0
    %185 = vmatprep.subr.mxu0 0.0
    %186 = vmatpush1.msra.mxu0 0.0
    %187 = vmatprep.subr.mxu0 0.0
    %188 = vmatpush1.msra.mxu0 0.0
    %189 = vmatprep.mubr.f32.mxu0 0.0
    %190 = vmatmul.mubr.f32.gmra.mrb[0].mxu0 %v110
    %v191 = vpop.f32.mrb[0].mxu0
    %v192 = vadd.f32 %v91, %v191
    %v193 = vpop.f32.mrb[0].mxu0
    %v194 = vadd.f32 %v95, %v193
    %195 = vdwg.mxu0
    %196 = vmatprep.subr.mxu0 %v81
    %197 = vmatpush1.msra.mxu0 %v80
    %198 = vmatprep.subr.mxu0 %v123
    %199 = vmatpush1.msra.mxu0 %v120
    %200 = vmatprep.subr.mxu0 0.0
    %201 = vmatpush1.msra.mxu0 0.0
    %202 = vmatprep.subr.mxu0 0.0
    %203 = vmatpush1.msra.mxu0 0.0
    %204 = vmatprep.subr.mxu0 0.0
    %205 = vmatpush1.msra.mxu0 0.0
    %206 = vmatprep.subr.mxu0 0.0
    %207 = vmatpush1.msra.mxu0 0.0
    %208 = vmatprep.subr.mxu0 0.0
    %209 = vmatpush1.msra.mxu0 0.0
    %210 = vmatprep.subr.mxu0 0.0
    %211 = vmatpush1.msra.mxu0 0.0
    %212 = vmatprep.subr.mxu0 0.0
    %213 = vmatpush1.msra.mxu0 0.0
    %214 = vmatprep.subr.mxu0 0.0
    %215 = vmatpush1.msra.mxu0 0.0
    %216 = vmatprep.subr.mxu0 0.0
    %217 = vmatpush1.msra.mxu0 0.0
    %218 = vmatprep.subr.mxu0 0.0
    %219 = vmatpush1.msra.mxu0 0.0
    %220 = vmatprep.subr.mxu0 0.0
    %221 = vmatpush1.msra.mxu0 0.0
    %222 = vmatprep.subr.mxu0 0.0
    %223 = vmatpush1.msra.mxu0 0.0
    %224 = vmatprep.subr.mxu0 0.0
    %225 = vmatpush1.msra.mxu0 0.0
    %226 = vmatprep.subr.mxu0 0.0
    %227 = vmatpush1.msra.mxu0 0.0
    %228 = vmatprep.subr.mxu0 0.0
    %229 = vmatpush1.msra.mxu0 0.0
    %230 = vmatprep.subr.mxu0 0.0
    %231 = vmatpush1.msra.mxu0 0.0
    %232 = vmatprep.subr.mxu0 0.0
    %233 = vmatpush1.msra.mxu0 0.0
    %234 = vmatprep.subr.mxu0 0.0
    %235 = vmatpush1.msra.mxu0 0.0
    %236 = vmatprep.subr.mxu0 0.0
    %237 = vmatpush1.msra.mxu0 0.0
    %238 = vmatprep.subr.mxu0 0.0
    %239 = vmatpush1.msra.mxu0 0.0
    %240 = vmatprep.subr.mxu0 0.0
    %241 = vmatpush1.msra.mxu0 0.0
    %242 = vmatprep.subr.mxu0 0.0
    %243 = vmatpush1.msra.mxu0 0.0
    %244 = vmatprep.subr.mxu0 0.0
    %245 = vmatpush1.msra.mxu0 0.0
    %246 = vmatprep.subr.mxu0 0.0
    %247 = vmatpush1.msra.mxu0 0.0
    %248 = vmatprep.subr.mxu0 0.0
    %249 = vmatpush1.msra.mxu0 0.0
    %250 = vmatprep.subr.mxu0 0.0
    %251 = vmatpush1.msra.mxu0 0.0
    %252 = vmatprep.subr.mxu0 0.0
    %253 = vmatpush1.msra.mxu0 0.0
    %254 = vmatprep.subr.mxu0 0.0
    %255 = vmatpush1.msra.mxu0 0.0
    %256 = vmatprep.subr.mxu0 0.0
    %257 = vmatpush1.msra.mxu0 0.0
    %258 = vmatprep.subr.mxu0 0.0
    %259 = vmatpush1.msra.mxu0 0.0
    %260 = vmatprep.mubr.f32.mxu0 0.0
    %261 = vmatmul.mubr.f32.gmra.mrb[0].mxu0 %v110
    %v262 = vpop.f32.mrb[0].mxu0
    %v263 = vadd.f32 %v99, %v262
    %v264 = vpop.f32.mrb[0].mxu0
    %v265 = vadd.f32 %v103, %v264
    %266 = vdwg.mxu0
    %v267 = vld [vmem:[#allocation7] sm:$0xff]
    %v268 = vld [vmem:[#allocation7 + $0x8] sm:$0xff]
    %v269 = vld [vmem:[#allocation7 + $0x10] sm:$0xff]
    %v270 = vld [vmem:[#allocation7 + $0x18] sm:$0xff]
    %v271 = vld [vmem:[#allocation7 + $0x20] sm:$0xff]
    %v272 = vld [vmem:[#allocation7 + $0x28] sm:$0xff]
    %v273 = vld [vmem:[#allocation7 + $0x30] sm:$0xff]
    %v274 = vld [vmem:[#allocation7 + $0x38] sm:$0xff]
    %v275 = vld [vmem:[#allocation7 + $0x40] sm:$0xff]
    %v276 = vld [vmem:[#allocation7 + $0x48] sm:$0xff]
    %v277 = vld [vmem:[#allocation7 + $0x50] sm:$0xff]
    %v278 = vld [vmem:[#allocation7 + $0x58] sm:$0xff]
    %v279 = vld [vmem:[#allocation7 + $0x60] sm:$0xff]
    %v280 = vld [vmem:[#allocation7 + $0x68] sm:$0xff]
    %v281 = vld [vmem:[#allocation7 + $0x70] sm:$0xff]
    %v282 = vld [vmem:[#allocation7 + $0x78] sm:$0xff]
    %v283 = vld [vmem:[#allocation7 + $0x80] sm:$0xff]
    %v284 = vld [vmem:[#allocation7 + $0x88] sm:$0xff]
    %v285 = vld [vmem:[#allocation7 + $0x90] sm:$0xff]
    %v286 = vld [vmem:[#allocation7 + $0x98] sm:$0xff]
    %v287 = vld [vmem:[#allocation7 + $0xa0] sm:$0xff]
    %v288 = vld [vmem:[#allocation7 + $0xa8] sm:$0xff]
    %v289 = vld [vmem:[#allocation7 + $0xb0] sm:$0xff]
    %v290 = vld [vmem:[#allocation7 + $0xb8] sm:$0xff]
    %v291 = vld [vmem:[#allocation7 + $0xc0] sm:$0xff]
    %v292 = vld [vmem:[#allocation7 + $0xc8] sm:$0xff]
    %v293 = vld [vmem:[#allocation7 + $0xd0] sm:$0xff]
    %v294 = vld [vmem:[#allocation7 + $0xd8] sm:$0xff]
    %v295 = vld [vmem:[#allocation7 + $0xe0] sm:$0xff]
    %v296 = vld [vmem:[#allocation7 + $0xe8] sm:$0xff]
    %v297 = vld [vmem:[#allocation7 + $0xf0] sm:$0xff]
    %v298 = vld [vmem:[#allocation7 + $0xf8] sm:$0xff]
    %v299 = vld [vmem:[#allocation7 + $0x100] sm:$0xff]
    %v300 = vld [vmem:[#allocation7 + $0x108] sm:$0xff]
    %v301 = vld [vmem:[#allocation7 + $0x110] sm:$0xff]
    %v302 = vld [vmem:[#allocation7 + $0x118] sm:$0xff]
    %v303 = vld [vmem:[#allocation7 + $0x120] sm:$0xff]
    %v304 = vld [vmem:[#allocation7 + $0x128] sm:$0xff]
    %v305 = vld [vmem:[#allocation7 + $0x130] sm:$0xff]
    %v306 = vld [vmem:[#allocation7 + $0x138] sm:$0xff]
    %v307 = vld [vmem:[#allocation7 + $0x140] sm:$0xff]
    %v308 = vld [vmem:[#allocation7 + $0x148] sm:$0xff]
    %v309 = vld [vmem:[#allocation7 + $0x150] sm:$0xff]
    %v310 = vld [vmem:[#allocation7 + $0x158] sm:$0xff]
    %v311 = vld [vmem:[#allocation7 + $0x160] sm:$0xff]
    %v312 = vld [vmem:[#allocation7 + $0x168] sm:$0xff]
    %v313 = vld [vmem:[#allocation7 + $0x170] sm:$0xff]
    %v314 = vld [vmem:[#allocation7 + $0x178] sm:$0xff]
    %v315 = vld [vmem:[#allocation7 + $0x180] sm:$0xff]
    %v316 = vld [vmem:[#allocation7 + $0x188] sm:$0xff]
    %v317 = vld [vmem:[#allocation7 + $0x190] sm:$0xff]
    %v318 = vld [vmem:[#allocation7 + $0x198] sm:$0xff]
    %v319 = vld [vmem:[#allocation7 + $0x1a0] sm:$0xff]
    %v320 = vld [vmem:[#allocation7 + $0x1a8] sm:$0xff]
    %v321 = vld [vmem:[#allocation7 + $0x1b0] sm:$0xff]
    %v322 = vld [vmem:[#allocation7 + $0x1b8] sm:$0xff]
    %v323 = vld [vmem:[#allocation7 + $0x1c0] sm:$0xff]
    %v324 = vld [vmem:[#allocation7 + $0x1c8] sm:$0xff]
    %v325 = vld [vmem:[#allocation7 + $0x1d0] sm:$0xff]
    %v326 = vld [vmem:[#allocation7 + $0x1d8] sm:$0xff]
    %v327 = vld [vmem:[#allocation7 + $0x1e0] sm:$0xff]
    %v328 = vld [vmem:[#allocation7 + $0x1e8] sm:$0xff]
    %v329 = vld [vmem:[#allocation7 + $0x1f0] sm:$0xff]
    %v330 = vld [vmem:[#allocation7 + $0x1f8] sm:$0xff]
    %331 = vmatprep.subr.mxu0 %v268
    %332 = vmatpush1.msra.mxu0 %v267
    %333 = vmatprep.subr.mxu0 %v272
    %334 = vmatpush1.msra.mxu0 %v271
    %335 = vmatprep.subr.mxu0 %v276
    %336 = vmatpush1.msra.mxu0 %v275
    %337 = vmatprep.subr.mxu0 %v280
    %338 = vmatpush1.msra.mxu0 %v279
    %339 = vmatprep.subr.mxu0 %v284
    %340 = vmatpush1.msra.mxu0 %v283
    %341 = vmatprep.subr.mxu0 %v288
    %342 = vmatpush1.msra.mxu0 %v287
    %343 = vmatprep.subr.mxu0 %v292
    %344 = vmatpush1.msra.mxu0 %v291
    %345 = vmatprep.subr.mxu0 %v296
    %346 = vmatpush1.msra.mxu0 %v295
    %347 = vmatprep.subr.mxu0 %v300
    %348 = vmatpush1.msra.mxu0 %v299
    %349 = vmatprep.subr.mxu0 %v304
    %350 = vmatpush1.msra.mxu0 %v303
    %351 = vmatprep.subr.mxu0 %v308
    %352 = vmatpush1.msra.mxu0 %v307
    %353 = vmatprep.subr.mxu0 %v312
    %354 = vmatpush1.msra.mxu0 %v311
    %355 = vmatprep.subr.mxu0 %v316
    %356 = vmatpush1.msra.mxu0 %v315
    %357 = vmatprep.subr.mxu0 %v320
    %358 = vmatpush1.msra.mxu0 %v319
    %359 = vmatprep.subr.mxu0 %v324
    %360 = vmatpush1.msra.mxu0 %v323
    %361 = vmatprep.subr.mxu0 %v328
    %362 = vmatpush1.msra.mxu0 %v327
    %363 = vmatprep.subr.mxu0 0.0
    %364 = vmatpush1.msra.mxu0 0.0
    %365 = vmatprep.subr.mxu0 0.0
    %366 = vmatpush1.msra.mxu0 0.0
    %367 = vmatprep.subr.mxu0 0.0
    %368 = vmatpush1.msra.mxu0 0.0
    %369 = vmatprep.subr.mxu0 0.0
    %370 = vmatpush1.msra.mxu0 0.0
    %371 = vmatprep.subr.mxu0 0.0
    %372 = vmatpush1.msra.mxu0 0.0
    %373 = vmatprep.subr.mxu0 0.0
    %374 = vmatpush1.msra.mxu0 0.0
    %375 = vmatprep.subr.mxu0 0.0
    %376 = vmatpush1.msra.mxu0 0.0
    %377 = vmatprep.subr.mxu0 0.0
    %378 = vmatpush1.msra.mxu0 0.0
    %379 = vmatprep.subr.mxu0 0.0
    %380 = vmatpush1.msra.mxu0 0.0
    %381 = vmatprep.subr.mxu0 0.0
    %382 = vmatpush1.msra.mxu0 0.0
    %383 = vmatprep.subr.mxu0 0.0
    %384 = vmatpush1.msra.mxu0 0.0
    %385 = vmatprep.subr.mxu0 0.0
    %386 = vmatpush1.msra.mxu0 0.0
    %387 = vmatprep.subr.mxu0 0.0
    %388 = vmatpush1.msra.mxu0 0.0
    %389 = vmatprep.subr.mxu0 0.0
    %390 = vmatpush1.msra.mxu0 0.0
    %391 = vmatprep.subr.mxu0 0.0
    %392 = vmatpush1.msra.mxu0 0.0
    %393 = vmatprep.subr.mxu0 0.0
    %394 = vmatpush1.msra.mxu0 0.0
    %395 = vmatprep.mubr.f32.mxu0 0.0
    %396 = vmatmul.mubr.f32.gmra.mrb[0].mxu0 0.0
    %v397 = vpop.f32.mrb[0].mxu0
    %v398 = vadd.f32 0.0, %v397
    %v399 = vpop.f32.mrb[0].mxu0
    %v400 = vadd.f32 0.0, %v399
    %401 = vdwg.mxu0
    %402 = vmatprep.subr.mxu0 %v270
    %403 = vmatpush1.msra.mxu0 %v269
    %404 = vmatprep.subr.mxu0 %v274
    %405 = vmatpush1.msra.mxu0 %v273
    %406 = vmatprep.subr.mxu0 %v278
    %407 = vmatpush1.msra.mxu0 %v277
    %408 = vmatprep.subr.mxu0 %v282
    %409 = vmatpush1.msra.mxu0 %v281
    %410 = vmatprep.subr.mxu0 %v286
    %411 = vmatpush1.msra.mxu0 %v285
    %412 = vmatprep.subr.mxu0 %v290
    %413 = vmatpush1.msra.mxu0 %v289
    %414 = vmatprep.subr.mxu0 %v294
    %415 = vmatpush1.msra.mxu0 %v293
    %416 = vmatprep.subr.mxu0 %v298
    %417 = vmatpush1.msra.mxu0 %v297
    %418 = vmatprep.subr.mxu0 %v302
    %419 = vmatpush1.msra.mxu0 %v301
    %420 = vmatprep.subr.mxu0 %v306
    %421 = vmatpush1.msra.mxu0 %v305
    %422 = vmatprep.subr.mxu0 %v310
    %423 = vmatpush1.msra.mxu0 %v309
    %424 = vmatprep.subr.mxu0 %v314
    %425 = vmatpush1.msra.mxu0 %v313
    %426 = vmatprep.subr.mxu0 %v318
    %427 = vmatpush1.msra.mxu0 %v317
    %428 = vmatprep.subr.mxu0 %v322
    %429 = vmatpush1.msra.mxu0 %v321
    %430 = vmatprep.subr.mxu0 %v326
    %431 = vmatpush1.msra.mxu0 %v325
    %432 = vmatprep.subr.mxu0 %v330
    %433 = vmatpush1.msra.mxu0 %v329
    %434 = vmatprep.subr.mxu0 0.0
    %435 = vmatpush1.msra.mxu0 0.0
    %436 = vmatprep.subr.mxu0 0.0
    %437 = vmatpush1.msra.mxu0 0.0
    %438 = vmatprep.subr.mxu0 0.0
    %439 = vmatpush1.msra.mxu0 0.0
    %440 = vmatprep.subr.mxu0 0.0
    %441 = vmatpush1.msra.mxu0 0.0
    %442 = vmatprep.subr.mxu0 0.0
    %443 = vmatpush1.msra.mxu0 0.0
    %444 = vmatprep.subr.mxu0 0.0
    %445 = vmatpush1.msra.mxu0 0.0
    %446 = vmatprep.subr.mxu0 0.0
    %447 = vmatpush1.msra.mxu0 0.0
    %448 = vmatprep.subr.mxu0 0.0
    %449 = vmatpush1.msra.mxu0 0.0
    %450 = vmatprep.subr.mxu0 0.0
    %451 = vmatpush1.msra.mxu0 0.0
    %452 = vmatprep.subr.mxu0 0.0
    %453 = vmatpush1.msra.mxu0 0.0
    %454 = vmatprep.subr.mxu0 0.0
    %455 = vmatpush1.msra.mxu0 0.0
    %456 = vmatprep.subr.mxu0 0.0
    %457 = vmatpush1.msra.mxu0 0.0
    %458 = vmatprep.subr.mxu0 0.0
    %459 = vmatpush1.msra.mxu0 0.0
    %460 = vmatprep.subr.mxu0 0.0
    %461 = vmatpush1.msra.mxu0 0.0
    %462 = vmatprep.subr.mxu0 0.0
    %463 = vmatpush1.msra.mxu0 0.0
    %464 = vmatprep.subr.mxu0 0.0
    %465 = vmatpush1.msra.mxu0 0.0
    %466 = vmatprep.mubr.f32.mxu0 0.0
    %467 = vmatmul.mubr.f32.gmra.mrb[0].mxu0 0.0
    %v468 = vpop.f32.mrb[0].mxu0
    %v469 = vadd.f32 0.0, %v468
    %v470 = vpop.f32.mrb[0].mxu0
    %v471 = vadd.f32 0.0, %v470
    %472 = vdwg.mxu0
    %v473 = vadd.f32 %v192, %v398
    %v474 = vadd.f32 %v194, %v400
    %v475 = vadd.f32 %v263, %v469
    %v476 = vadd.f32 %v265, %v471
    %v477 = vxor.u32 %v473, 2147483648
    %v478 = vmul.f32 %v477, 1.442695
    %v479 = vpow.pop %v478
    %v480 = vadd.f32 %v479, 1.0
    %v481 = vrcp.pop %v480
    %v482 = vmul.f32 1.0, %v481
    %v483 = vxor.u32 %v474, 2147483648
    %v484 = vmul.f32 %v483, 1.442695
    %v485 = vpow.pop %v484
    %v486 = vadd.f32 %v485, 1.0
    %v487 = vrcp.pop %v486
    %v488 = vmul.f32 1.0, %v487
    %v489 = vtanh.pop %v475
    %v490 = vxor.u32 %v476, 2147483648
    %v491 = vmul.f32 %v490, 1.442695
    %v492 = vpow.pop %v491
    %v493 = vadd.f32 %v492, 1.0
    %v494 = vrcp.pop %v493
    %v495 = vmul.f32 1.0, %v494
    %v496 = vmul.f32 %v488, 0.0
    %v497 = vmul.f32 %v482, %v489
    %v498 = vadd.f32 %v496, %v497
    %v499 = vtanh.pop %v498
    %v500 = vmul.f32 %v495, %v499
    %501 = vmatprep.subr.mxu0 %v268
    %502 = vmatpush1.msra.mxu0 %v267
    %503 = vmatprep.subr.mxu0 %v272
    %504 = vmatpush1.msra.mxu0 %v271
    %505 = vmatprep.subr.mxu0 %v276
    %506 = vmatpush1.msra.mxu0 %v275
    %507 = vmatprep.subr.mxu0 %v280
    %508 = vmatpush1.msra.mxu0 %v279
    %509 = vmatprep.subr.mxu0 %v284
    %510 = vmatpush1.msra.mxu0 %v283
    %511 = vmatprep.subr.mxu0 %v288
    %512 = vmatpush1.msra.mxu0 %v287
    %513 = vmatprep.subr.mxu0 %v292
    %514 = vmatpush1.msra.mxu0 %v291
    %515 = vmatprep.subr.mxu0 %v296
    %516 = vmatpush1.msra.mxu0 %v295
    %517 = vmatprep.subr.mxu0 %v300
    %518 = vmatpush1.msra.mxu0 %v299
    %519 = vmatprep.subr.mxu0 %v304
    %520 = vmatpush1.msra.mxu0 %v303
    %521 = vmatprep.subr.mxu0 %v308
    %522 = vmatpush1.msra.mxu0 %v307
    %523 = vmatprep.subr.mxu0 %v312
    %524 = vmatpush1.msra.mxu0 %v311
    %525 = vmatprep.subr.mxu0 %v316
    %526 = vmatpush1.msra.mxu0 %v315
    %527 = vmatprep.subr.mxu0 %v320
    %528 = vmatpush1.msra.mxu0 %v319
    %529 = vmatprep.subr.mxu0 %v324
    %530 = vmatpush1.msra.mxu0 %v323
    %531 = vmatprep.subr.mxu0 %v328
    %532 = vmatpush1.msra.mxu0 %v327
    %533 = vmatprep.subr.mxu0 0.0
    %534 = vmatpush1.msra.mxu0 0.0
    %535 = vmatprep.subr.mxu0 0.0
    %536 = vmatpush1.msra.mxu0 0.0
    %537 = vmatprep.subr.mxu0 0.0
    %538 = vmatpush1.msra.mxu0 0.0
    %539 = vmatprep.subr.mxu0 0.0
    %540 = vmatpush1.msra.mxu0 0.0
    %541 = vmatprep.subr.mxu0 0.0
    %542 = vmatpush1.msra.mxu0 0.0
    %543 = vmatprep.subr.mxu0 0.0
    %544 = vmatpush1.msra.mxu0 0.0
    %545 = vmatprep.subr.mxu0 0.0
    %546 = vmatpush1.msra.mxu0 0.0
    %547 = vmatprep.subr.mxu0 0.0
    %548 = vmatpush1.msra.mxu0 0.0
    %549 = vmatprep.subr.mxu0 0.0
    %550 = vmatpush1.msra.mxu0 0.0
    %551 = vmatprep.subr.mxu0 0.0
    %552 = vmatpush1.msra.mxu0 0.0
    %553 = vmatprep.subr.mxu0 0.0
    %554 = vmatpush1.msra.mxu0 0.0
    %555 = vmatprep.subr.mxu0 0.0
    %556 = vmatpush1.msra.mxu0 0.0
    %557 = vmatprep.subr.mxu0 0.0
    %558 = vmatpush1.msra.mxu0 0.0
    %559 = vmatprep.subr.mxu0 0.0
    %560 = vmatpush1.msra.mxu0 0.0
    %561 = vmatprep.subr.mxu0 0.0
    %562 = vmatpush1.msra.mxu0 0.0
    %563 = vmatprep.subr.mxu0 0.0
    %564 = vmatpush1.msra.mxu0 0.0
    %565 = vmatprep.mubr.f32.mxu0 0.0
    %566 = vmatmul.mubr.f32.gmra.mrb[0].mxu0 %v500
    %v567 = vpop.f32.mrb[0].mxu0
    %v568 = vadd.f32 0.0, %v567
    %v569 = vpop.f32.mrb[0].mxu0
    %v570 = vadd.f32 0.0, %v569
    %571 = vdwg.mxu0
    %572 = vmatprep.subr.mxu0 %v270
    %573 = vmatpush1.msra.mxu0 %v269
    %574 = vmatprep.subr.mxu0 %v274
    %575 = vmatpush1.msra.mxu0 %v273
    %576 = vmatprep.subr.mxu0 %v278
    %577 = vmatpush1.msra.mxu0 %v277
    %578 = vmatprep.subr.mxu0 %v282
    %579 = vmatpush1.msra.mxu0 %v281
    %580 = vmatprep.subr.mxu0 %v286
    %581 = vmatpush1.msra.mxu0 %v285
    %582 = vmatprep.subr.mxu0 %v290
    %583 = vmatpush1.msra.mxu0 %v289
    %584 = vmatprep.subr.mxu0 %v294
    %585 = vmatpush1.msra.mxu0 %v293
    %586 = vmatprep.subr.mxu0 %v298
    %587 = vmatpush1.msra.mxu0 %v297
    %588 = vmatprep.subr.mxu0 %v302
    %589 = vmatpush1.msra.mxu0 %v301
    %590 = vmatprep.subr.mxu0 %v306
    %591 = vmatpush1.msra.mxu0 %v305
    %592 = vmatprep.subr.mxu0 %v310
    %593 = vmatpush1.msra.mxu0 %v309
    %594 = vmatprep.subr.mxu0 %v314
    %595 = vmatpush1.msra.mxu0 %v313
    %596 = vmatprep.subr.mxu0 %v318
    %597 = vmatpush1.msra.mxu0 %v317
    %598 = vmatprep.subr.mxu0 %v322
    %599 = vmatpush1.msra.mxu0 %v321
    %600 = vmatprep.subr.mxu0 %v326
    %601 = vmatpush1.msra.mxu0 %v325
    %602 = vmatprep.subr.mxu0 %v330
    %603 = vmatpush1.msra.mxu0 %v329
    %604 = vmatprep.subr.mxu0 0.0
    %605 = vmatpush1.msra.mxu0 0.0
    %606 = vmatprep.subr.mxu0 0.0
    %607 = vmatpush1.msra.mxu0 0.0
    %608 = vmatprep.subr.mxu0 0.0
    %609 = vmatpush1.msra.mxu0 0.0
    %610 = vmatprep.subr.mxu0 0.0
    %611 = vmatpush1.msra.mxu0 0.0
    %612 = vmatprep.subr.mxu0 0.0
    %613 = vmatpush1.msra.mxu0 0.0
    %614 = vmatprep.subr.mxu0 0.0
    %615 = vmatpush1.msra.mxu0 0.0
    %616 = vmatprep.subr.mxu0 0.0
    %617 = vmatpush1.msra.mxu0 0.0
    %618 = vmatprep.subr.mxu0 0.0
    %619 = vmatpush1.msra.mxu0 0.0
    %620 = vmatprep.subr.mxu0 0.0
    %621 = vmatpush1.msra.mxu0 0.0
    %622 = vmatprep.subr.mxu0 0.0
    %623 = vmatpush1.msra.mxu0 0.0
    %624 = vmatprep.subr.mxu0 0.0
    %625 = vmatpush1.msra.mxu0 0.0
    %626 = vmatprep.subr.mxu0 0.0
    %627 = vmatpush1.msra.mxu0 0.0
    %628 = vmatprep.subr.mxu0 0.0
    %629 = vmatpush1.msra.mxu0 0.0
    %630 = vmatprep.subr.mxu0 0.0
    %631 = vmatpush1.msra.mxu0 0.0
    %632 = vmatprep.subr.mxu0 0.0
    %633 = vmatpush1.msra.mxu0 0.0
    %634 = vmatprep.subr.mxu0 0.0
    %635 = vmatpush1.msra.mxu0 0.0
    %636 = vmatprep.mubr.f32.mxu0 0.0
    %637 = vmatmul.mubr.f32.gmra.mrb[0].mxu0 %v500
    %v638 = vpop.f32.mrb[0].mxu0
    %v639 = vadd.f32 0.0, %v638
    %v640 = vpop.f32.mrb[0].mxu0
    %v641 = vadd.f32 0.0, %v640
    %642 = vdwg.mxu0
    %v647 = vrot.slane %v568, 7
    %v648 = vrot.slane %v570, 7
    %v649 = vrot.slane %v639, 7
    %v650 = vrot.slane %v641, 7
    %v655 = vadd.f32 %v192, %v647
    %v656 = vadd.f32 %v194, %v648
    %v657 = vadd.f32 %v263, %v649
    %v658 = vadd.f32 %v265, %v650
    %v659 = vxor.u32 %v655, 2147483648
    %v660 = vmul.f32 %v659, 1.442695
    %v661 = vpow.pop %v660
    %v662 = vadd.f32 %v661, 1.0
    %v663 = vrcp.pop %v662
    %v664 = vmul.f32 1.0, %v663
    %v665 = vxor.u32 %v656, 2147483648
    %v666 = vmul.f32 %v665, 1.442695
    %v667 = vpow.pop %v666
    %v668 = vadd.f32 %v667, 1.0
    %v669 = vrcp.pop %v668
    %v670 = vmul.f32 1.0, %v669
    %v671 = vtanh.pop %v657
    %v672 = vxor.u32 %v658, 2147483648
    %v673 = vmul.f32 %v672, 1.442695
    %v674 = vpow.pop %v673
    %v675 = vadd.f32 %v674, 1.0
    %v676 = vrcp.pop %v675
    %v677 = vmul.f32 1.0, %v676
    %v679 = vrot.slane %v498, 7
    %v681 = vmul.f32 %v670, %v679
    %v682 = vmul.f32 %v664, %v671
    %v683 = vadd.f32 %v681, %v682
    %v684 = vtanh.pop %v683
    %v685 = vmul.f32 %v677, %v684
    %v687 = vrot.slane %v685, 1
    %689 = vmatprep.subr.mxu0 %v268
    %690 = vmatpush1.msra.mxu0 %v267
    %691 = vmatprep.subr.mxu0 %v272
    %692 = vmatpush1.msra.mxu0 %v271
    %693 = vmatprep.subr.mxu0 %v276
    %694 = vmatpush1.msra.mxu0 %v275
    %695 = vmatprep.subr.mxu0 %v280
    %696 = vmatpush1.msra.mxu0 %v279
    %697 = vmatprep.subr.mxu0 %v284
    %698 = vmatpush1.msra.mxu0 %v283
    %699 = vmatprep.subr.mxu0 %v288
    %700 = vmatpush1.msra.mxu0 %v287
    %701 = vmatprep.subr.mxu0 %v292
    %702 = vmatpush1.msra.mxu0 %v291
    %703 = vmatprep.subr.mxu0 %v296
    %704 = vmatpush1.msra.mxu0 %v295
    %705 = vmatprep.subr.mxu0 %v300
    %706 = vmatpush1.msra.mxu0 %v299
    %707 = vmatprep.subr.mxu0 %v304
    %708 = vmatpush1.msra.mxu0 %v303
    %709 = vmatprep.subr.mxu0 %v308
    %710 = vmatpush1.msra.mxu0 %v307
    %711 = vmatprep.subr.mxu0 %v312
    %712 = vmatpush1.msra.mxu0 %v311
    %713 = vmatprep.subr.mxu0 %v316
    %714 = vmatpush1.msra.mxu0 %v315
    %715 = vmatprep.subr.mxu0 %v320
    %716 = vmatpush1.msra.mxu0 %v319
    %717 = vmatprep.subr.mxu0 %v324
    %718 = vmatpush1.msra.mxu0 %v323
    %719 = vmatprep.subr.mxu0 %v328
    %720 = vmatpush1.msra.mxu0 %v327
    %721 = vmatprep.subr.mxu0 0.0
    %722 = vmatpush1.msra.mxu0 0.0
    %723 = vmatprep.subr.mxu0 0.0
    %724 = vmatpush1.msra.mxu0 0.0
    %725 = vmatprep.subr.mxu0 0.0
    %726 = vmatpush1.msra.mxu0 0.0
    %727 = vmatprep.subr.mxu0 0.0
    %728 = vmatpush1.msra.mxu0 0.0
    %729 = vmatprep.subr.mxu0 0.0
    %730 = vmatpush1.msra.mxu0 0.0
    %731 = vmatprep.subr.mxu0 0.0
    %732 = vmatpush1.msra.mxu0 0.0
    %733 = vmatprep.subr.mxu0 0.0
    %734 = vmatpush1.msra.mxu0 0.0
    %735 = vmatprep.subr.mxu0 0.0
    %736 = vmatpush1.msra.mxu0 0.0
    %737 = vmatprep.subr.mxu0 0.0
    %738 = vmatpush1.msra.mxu0 0.0
    %739 = vmatprep.subr.mxu0 0.0
    %740 = vmatpush1.msra.mxu0 0.0
    %741 = vmatprep.subr.mxu0 0.0
    %742 = vmatpush1.msra.mxu0 0.0
    %743 = vmatprep.subr.mxu0 0.0
    %744 = vmatpush1.msra.mxu0 0.0
    %745 = vmatprep.subr.mxu0 0.0
    %746 = vmatpush1.msra.mxu0 0.0
    %747 = vmatprep.subr.mxu0 0.0
    %748 = vmatpush1.msra.mxu0 0.0
    %749 = vmatprep.subr.mxu0 0.0
    %750 = vmatpush1.msra.mxu0 0.0
    %751 = vmatprep.subr.mxu0 0.0
    %752 = vmatpush1.msra.mxu0 0.0
    %753 = vmatprep.mubr.f32.mxu0 0.0
    %754 = vmatmul.mubr.f32.gmra.mrb[0].mxu0 %v687
    %v755 = vpop.f32.mrb[0].mxu0
    %v756 = vadd.f32 0.0, %v755
    %v757 = vpop.f32.mrb[0].mxu0
    %v758 = vadd.f32 0.0, %v757
    %759 = vdwg.mxu0
    %760 = vmatprep.subr.mxu0 %v270
    %761 = vmatpush1.msra.mxu0 %v269
    %762 = vmatprep.subr.mxu0 %v274
    %763 = vmatpush1.msra.mxu0 %v273
    %764 = vmatprep.subr.mxu0 %v278
    %765 = vmatpush1.msra.mxu0 %v277
    %766 = vmatprep.subr.mxu0 %v282
    %767 = vmatpush1.msra.mxu0 %v281
    %768 = vmatprep.subr.mxu0 %v286
    %769 = vmatpush1.msra.mxu0 %v285
    %770 = vmatprep.subr.mxu0 %v290
    %771 = vmatpush1.msra.mxu0 %v289
    %772 = vmatprep.subr.mxu0 %v294
    %773 = vmatpush1.msra.mxu0 %v293
    %774 = vmatprep.subr.mxu0 %v298
    %775 = vmatpush1.msra.mxu0 %v297
    %776 = vmatprep.subr.mxu0 %v302
    %777 = vmatpush1.msra.mxu0 %v301
    %778 = vmatprep.subr.mxu0 %v306
    %779 = vmatpush1.msra.mxu0 %v305
    %780 = vmatprep.subr.mxu0 %v310
    %781 = vmatpush1.msra.mxu0 %v309
    %782 = vmatprep.subr.mxu0 %v314
    %783 = vmatpush1.msra.mxu0 %v313
    %784 = vmatprep.subr.mxu0 %v318
    %785 = vmatpush1.msra.mxu0 %v317
    %786 = vmatprep.subr.mxu0 %v322
    %787 = vmatpush1.msra.mxu0 %v321
    %788 = vmatprep.subr.mxu0 %v326
    %789 = vmatpush1.msra.mxu0 %v325
    %790 = vmatprep.subr.mxu0 %v330
    %791 = vmatpush1.msra.mxu0 %v329
    %792 = vmatprep.subr.mxu0 0.0
    %793 = vmatpush1.msra.mxu0 0.0
    %794 = vmatprep.subr.mxu0 0.0
    %795 = vmatpush1.msra.mxu0 0.0
    %796 = vmatprep.subr.mxu0 0.0
    %797 = vmatpush1.msra.mxu0 0.0
    %798 = vmatprep.subr.mxu0 0.0
    %799 = vmatpush1.msra.mxu0 0.0
    %800 = vmatprep.subr.mxu0 0.0
    %801 = vmatpush1.msra.mxu0 0.0
    %802 = vmatprep.subr.mxu0 0.0
    %803 = vmatpush1.msra.mxu0 0.0
    %804 = vmatprep.subr.mxu0 0.0
    %805 = vmatpush1.msra.mxu0 0.0
    %806 = vmatprep.subr.mxu0 0.0
    %807 = vmatpush1.msra.mxu0 0.0
    %808 = vmatprep.subr.mxu0 0.0
    %809 = vmatpush1.msra.mxu0 0.0
    %810 = vmatprep.subr.mxu0 0.0
    %811 = vmatpush1.msra.mxu0 0.0
    %812 = vmatprep.subr.mxu0 0.0
    %813 = vmatpush1.msra.mxu0 0.0
    %814 = vmatprep.subr.mxu0 0.0
    %815 = vmatpush1.msra.mxu0 0.0
    %816 = vmatprep.subr.mxu0 0.0
    %817 = vmatpush1.msra.mxu0 0.0
    %818 = vmatprep.subr.mxu0 0.0
    %819 = vmatpush1.msra.mxu0 0.0
    %820 = vmatprep.subr.mxu0 0.0
    %821 = vmatpush1.msra.mxu0 0.0
    %822 = vmatprep.subr.mxu0 0.0
    %823 = vmatpush1.msra.mxu0 0.0
    %824 = vmatprep.mubr.f32.mxu0 0.0
    %825 = vmatmul.mubr.f32.gmra.mrb[0].mxu0 %v687
    %v826 = vpop.f32.mrb[0].mxu0
    %v827 = vadd.f32 0.0, %v826
    %v828 = vpop.f32.mrb[0].mxu0
    %v829 = vadd.f32 0.0, %v828
    %830 = vdwg.mxu0
    %v835 = vrot.slane %v756, 6
    %v836 = vrot.slane %v758, 6
    %v837 = vrot.slane %v827, 6
    %v838 = vrot.slane %v829, 6
    %v843 = vadd.f32 %v192, %v835
    %v844 = vadd.f32 %v194, %v836
    %v845 = vadd.f32 %v263, %v837
    %v846 = vadd.f32 %v265, %v838
    %v847 = vxor.u32 %v843, 2147483648
    %v848 = vmul.f32 %v847, 1.442695
    %v849 = vpow.pop %v848
    %v850 = vadd.f32 %v849, 1.0
    %v851 = vrcp.pop %v850
    %v852 = vmul.f32 1.0, %v851
    %v853 = vxor.u32 %v844, 2147483648
    %v854 = vmul.f32 %v853, 1.442695
    %v855 = vpow.pop %v854
    %v856 = vadd.f32 %v855, 1.0
    %v857 = vrcp.pop %v856
    %v858 = vmul.f32 1.0, %v857
    %v859 = vtanh.pop %v845
    %v860 = vxor.u32 %v846, 2147483648
    %v861 = vmul.f32 %v860, 1.442695
    %v862 = vpow.pop %v861
    %v863 = vadd.f32 %v862, 1.0
    %v864 = vrcp.pop %v863
    %v865 = vmul.f32 1.0, %v864
    %v867 = vrot.slane %v683, 7
    %v869 = vmul.f32 %v858, %v867
    %v870 = vmul.f32 %v852, %v859
    %v871 = vadd.f32 %v869, %v870
    %v872 = vtanh.pop %v871
    %v873 = vmul.f32 %v865, %v872
    %v875 = vrot.slane %v873, 2
    %877 = vmatprep.subr.mxu0 %v268
    %878 = vmatpush1.msra.mxu0 %v267
    %879 = vmatprep.subr.mxu0 %v272
    %880 = vmatpush1.msra.mxu0 %v271
    %881 = vmatprep.subr.mxu0 %v276
    %882 = vmatpush1.msra.mxu0 %v275
    %883 = vmatprep.subr.mxu0 %v280
    %884 = vmatpush1.msra.mxu0 %v279
    %885 = vmatprep.subr.mxu0 %v284
    %886 = vmatpush1.msra.mxu0 %v283
    %887 = vmatprep.subr.mxu0 %v288
    %888 = vmatpush1.msra.mxu0 %v287
    %889 = vmatprep.subr.mxu0 %v292
    %890 = vmatpush1.msra.mxu0 %v291
    %891 = vmatprep.subr.mxu0 %v296
    %892 = vmatpush1.msra.mxu0 %v295
    %893 = vmatprep.subr.mxu0 %v300
    %894 = vmatpush1.msra.mxu0 %v299
    %895 = vmatprep.subr.mxu0 %v304
    %896 = vmatpush1.msra.mxu0 %v303
    %897 = vmatprep.subr.mxu0 %v308
    %898 = vmatpush1.msra.mxu0 %v307
    %899 = vmatprep.subr.mxu0 %v312
    %900 = vmatpush1.msra.mxu0 %v311
    %901 = vmatprep.subr.mxu0 %v316
    %902 = vmatpush1.msra.mxu0 %v315
    %903 = vmatprep.subr.mxu0 %v320
    %904 = vmatpush1.msra.mxu0 %v319
    %905 = vmatprep.subr.mxu0 %v324
    %906 = vmatpush1.msra.mxu0 %v323
    %907 = vmatprep.subr.mxu0 %v328
    %908 = vmatpush1.msra.mxu0 %v327
    %909 = vmatprep.subr.mxu0 0.0
    %910 = vmatpush1.msra.mxu0 0.0
    %911 = vmatprep.subr.mxu0 0.0
    %912 = vmatpush1.msra.mxu0 0.0
    %913 = vmatprep.subr.mxu0 0.0
    %914 = vmatpush1.msra.mxu0 0.0
    %915 = vmatprep.subr.mxu0 0.0
    %916 = vmatpush1.msra.mxu0 0.0
    %917 = vmatprep.subr.mxu0 0.0
    %918 = vmatpush1.msra.mxu0 0.0
    %919 = vmatprep.subr.mxu0 0.0
    %920 = vmatpush1.msra.mxu0 0.0
    %921 = vmatprep.subr.mxu0 0.0
    %922 = vmatpush1.msra.mxu0 0.0
    %923 = vmatprep.subr.mxu0 0.0
    %924 = vmatpush1.msra.mxu0 0.0
    %925 = vmatprep.subr.mxu0 0.0
    %926 = vmatpush1.msra.mxu0 0.0
    %927 = vmatprep.subr.mxu0 0.0
    %928 = vmatpush1.msra.mxu0 0.0
    %929 = vmatprep.subr.mxu0 0.0
    %930 = vmatpush1.msra.mxu0 0.0
    %931 = vmatprep.subr.mxu0 0.0
    %932 = vmatpush1.msra.mxu0 0.0
    %933 = vmatprep.subr.mxu0 0.0
    %934 = vmatpush1.msra.mxu0 0.0
    %935 = vmatprep.subr.mxu0 0.0
    %936 = vmatpush1.msra.mxu0 0.0
    %937 = vmatprep.subr.mxu0 0.0
    %938 = vmatpush1.msra.mxu0 0.0
    %939 = vmatprep.subr.mxu0 0.0
    %940 = vmatpush1.msra.mxu0 0.0
    %941 = vmatprep.mubr.f32.mxu0 0.0
    %942 = vmatmul.mubr.f32.gmra.mrb[0].mxu0 %v875
    %v943 = vpop.f32.mrb[0].mxu0
    %v944 = vadd.f32 0.0, %v943
    %v945 = vpop.f32.mrb[0].mxu0
    %v946 = vadd.f32 0.0, %v945
    %947 = vdwg.mxu0
    %948 = vmatprep.subr.mxu0 %v270
    %949 = vmatpush1.msra.mxu0 %v269
    %950 = vmatprep.subr.mxu0 %v274
    %951 = vmatpush1.msra.mxu0 %v273
    %952 = vmatprep.subr.mxu0 %v278
    %953 = vmatpush1.msra.mxu0 %v277
    %954 = vmatprep.subr.mxu0 %v282
    %955 = vmatpush1.msra.mxu0 %v281
    %956 = vmatprep.subr.mxu0 %v286
    %957 = vmatpush1.msra.mxu0 %v285
    %958 = vmatprep.subr.mxu0 %v290
    %959 = vmatpush1.msra.mxu0 %v289
    %960 = vmatprep.subr.mxu0 %v294
    %961 = vmatpush1.msra.mxu0 %v293
    %962 = vmatprep.subr.mxu0 %v298
    %963 = vmatpush1.msra.mxu0 %v297
    %964 = vmatprep.subr.mxu0 %v302
    %965 = vmatpush1.msra.mxu0 %v301
    %966 = vmatprep.subr.mxu0 %v306
    %967 = vmatpush1.msra.mxu0 %v305
    %968 = vmatprep.subr.mxu0 %v310
    %969 = vmatpush1.msra.mxu0 %v309
    %970 = vmatprep.subr.mxu0 %v314
    %971 = vmatpush1.msra.mxu0 %v313
    %972 = vmatprep.subr.mxu0 %v318
    %973 = vmatpush1.msra.mxu0 %v317
    %974 = vmatprep.subr.mxu0 %v322
    %975 = vmatpush1.msra.mxu0 %v321
    %976 = vmatprep.subr.mxu0 %v326
    %977 = vmatpush1.msra.mxu0 %v325
    %978 = vmatprep.subr.mxu0 %v330
    %979 = vmatpush1.msra.mxu0 %v329
    %980 = vmatprep.subr.mxu0 0.0
    %981 = vmatpush1.msra.mxu0 0.0
    %982 = vmatprep.subr.mxu0 0.0
    %983 = vmatpush1.msra.mxu0 0.0
    %984 = vmatprep.subr.mxu0 0.0
    %985 = vmatpush1.msra.mxu0 0.0
    %986 = vmatprep.subr.mxu0 0.0
    %987 = vmatpush1.msra.mxu0 0.0
    %988 = vmatprep.subr.mxu0 0.0
    %989 = vmatpush1.msra.mxu0 0.0
    %990 = vmatprep.subr.mxu0 0.0
    %991 = vmatpush1.msra.mxu0 0.0
    %992 = vmatprep.subr.mxu0 0.0
    %993 = vmatpush1.msra.mxu0 0.0
    %994 = vmatprep.subr.mxu0 0.0
    %995 = vmatpush1.msra.mxu0 0.0
    %996 = vmatprep.subr.mxu0 0.0
    %997 = vmatpush1.msra.mxu0 0.0
    %998 = vmatprep.subr.mxu0 0.0
    %999 = vmatpush1.msra.mxu0 0.0
    %1000 = vmatprep.subr.mxu0 0.0
    %1001 = vmatpush1.msra.mxu0 0.0
    %1002 = vmatprep.subr.mxu0 0.0
    %1003 = vmatpush1.msra.mxu0 0.0
    %1004 = vmatprep.subr.mxu0 0.0
    %1005 = vmatpush1.msra.mxu0 0.0
    %1006 = vmatprep.subr.mxu0 0.0
    %1007 = vmatpush1.msra.mxu0 0.0
    %1008 = vmatprep.subr.mxu0 0.0
    %1009 = vmatpush1.msra.mxu0 0.0
    %1010 = vmatprep.subr.mxu0 0.0
    %1011 = vmatpush1.msra.mxu0 0.0
    %1012 = vmatprep.mubr.f32.mxu0 0.0
    %1013 = vmatmul.mubr.f32.gmra.mrb[0].mxu0 %v875
    %v1014 = vpop.f32.mrb[0].mxu0
    %v1015 = vadd.f32 0.0, %v1014
    %v1016 = vpop.f32.mrb[0].mxu0
    %v1017 = vadd.f32 0.0, %v1016
    %1018 = vdwg.mxu0
    %v1023 = vrot.slane %v944, 5
    %v1024 = vrot.slane %v946, 5
    %v1025 = vrot.slane %v1015, 5
    %v1026 = vrot.slane %v1017, 5
    %v1031 = vadd.f32 %v192, %v1023
    %v1032 = vadd.f32 %v194, %v1024
    %v1033 = vadd.f32 %v263, %v1025
    %v1034 = vadd.f32 %v265, %v1026
    %v1035 = vxor.u32 %v1031, 2147483648
    %v1036 = vmul.f32 %v1035, 1.442695
    %v1037 = vpow.pop %v1036
    %v1038 = vadd.f32 %v1037, 1.0
    %v1039 = vrcp.pop %v1038
    %v1040 = vmul.f32 1.0, %v1039
    %v1041 = vxor.u32 %v1032, 2147483648
    %v1042 = vmul.f32 %v1041, 1.442695
    %v1043 = vpow.pop %v1042
    %v1044 = vadd.f32 %v1043, 1.0
    %v1045 = vrcp.pop %v1044
    %v1046 = vmul.f32 1.0, %v1045
    %v1047 = vtanh.pop %v1033
    %v1048 = vxor.u32 %v1034, 2147483648
    %v1049 = vmul.f32 %v1048, 1.442695
    %v1050 = vpow.pop %v1049
    %v1051 = vadd.f32 %v1050, 1.0
    %v1052 = vrcp.pop %v1051
    %v1053 = vmul.f32 1.0, %v1052
    %v1055 = vrot.slane %v871, 7
    %v1057 = vmul.f32 %v1046, %v1055
    %v1058 = vmul.f32 %v1040, %v1047
    %v1059 = vadd.f32 %v1057, %v1058
    %v1060 = vtanh.pop %v1059
    %v1061 = vmul.f32 %v1053, %v1060
    %v1063 = vrot.slane %v1061, 3
    %1065 = vmatprep.subr.mxu0 %v268
    %1066 = vmatpush1.msra.mxu0 %v267
    %1067 = vmatprep.subr.mxu0 %v272
    %1068 = vmatpush1.msra.mxu0 %v271
    %1069 = vmatprep.subr.mxu0 %v276
    %1070 = vmatpush1.msra.mxu0 %v275
    %1071 = vmatprep.subr.mxu0 %v280
    %1072 = vmatpush1.msra.mxu0 %v279
    %1073 = vmatprep.subr.mxu0 %v284
    %1074 = vmatpush1.msra.mxu0 %v283
    %1075 = vmatprep.subr.mxu0 %v288
    %1076 = vmatpush1.msra.mxu0 %v287
    %1077 = vmatprep.subr.mxu0 %v292
    %1078 = vmatpush1.msra.mxu0 %v291
    %1079 = vmatprep.subr.mxu0 %v296
    %1080 = vmatpush1.msra.mxu0 %v295
    %1081 = vmatprep.subr.mxu0 %v300
    %1082 = vmatpush1.msra.mxu0 %v299
    %1083 = vmatprep.subr.mxu0 %v304
    %1084 = vmatpush1.msra.mxu0 %v303
    %1085 = vmatprep.subr.mxu0 %v308
    %1086 = vmatpush1.msra.mxu0 %v307
    %1087 = vmatprep.subr.mxu0 %v312
    %1088 = vmatpush1.msra.mxu0 %v311
    %1089 = vmatprep.subr.mxu0 %v316
    %1090 = vmatpush1.msra.mxu0 %v315
    %1091 = vmatprep.subr.mxu0 %v320
    %1092 = vmatpush1.msra.mxu0 %v319
    %1093 = vmatprep.subr.mxu0 %v324
    %1094 = vmatpush1.msra.mxu0 %v323
    %1095 = vmatprep.subr.mxu0 %v328
    %1096 = vmatpush1.msra.mxu0 %v327
    %1097 = vmatprep.subr.mxu0 0.0
    %1098 = vmatpush1.msra.mxu0 0.0
    %1099 = vmatprep.subr.mxu0 0.0
    %1100 = vmatpush1.msra.mxu0 0.0
    %1101 = vmatprep.subr.mxu0 0.0
    %1102 = vmatpush1.msra.mxu0 0.0
    %1103 = vmatprep.subr.mxu0 0.0
    %1104 = vmatpush1.msra.mxu0 0.0
    %1105 = vmatprep.subr.mxu0 0.0
    %1106 = vmatpush1.msra.mxu0 0.0
    %1107 = vmatprep.subr.mxu0 0.0
    %1108 = vmatpush1.msra.mxu0 0.0
    %1109 = vmatprep.subr.mxu0 0.0
    %1110 = vmatpush1.msra.mxu0 0.0
    %1111 = vmatprep.subr.mxu0 0.0
    %1112 = vmatpush1.msra.mxu0 0.0
    %1113 = vmatprep.subr.mxu0 0.0
    %1114 = vmatpush1.msra.mxu0 0.0
    %1115 = vmatprep.subr.mxu0 0.0
    %1116 = vmatpush1.msra.mxu0 0.0
    %1117 = vmatprep.subr.mxu0 0.0
    %1118 = vmatpush1.msra.mxu0 0.0
    %1119 = vmatprep.subr.mxu0 0.0
    %1120 = vmatpush1.msra.mxu0 0.0
    %1121 = vmatprep.subr.mxu0 0.0
    %1122 = vmatpush1.msra.mxu0 0.0
    %1123 = vmatprep.subr.mxu0 0.0
    %1124 = vmatpush1.msra.mxu0 0.0
    %1125 = vmatprep.subr.mxu0 0.0
    %1126 = vmatpush1.msra.mxu0 0.0
    %1127 = vmatprep.subr.mxu0 0.0
    %1128 = vmatpush1.msra.mxu0 0.0
    %1129 = vmatprep.mubr.f32.mxu0 0.0
    %1130 = vmatmul.mubr.f32.gmra.mrb[0].mxu0 %v1063
    %v1131 = vpop.f32.mrb[0].mxu0
    %v1132 = vadd.f32 0.0, %v1131
    %v1133 = vpop.f32.mrb[0].mxu0
    %v1134 = vadd.f32 0.0, %v1133
    %1135 = vdwg.mxu0
    %1136 = vmatprep.subr.mxu0 %v270
    %1137 = vmatpush1.msra.mxu0 %v269
    %1138 = vmatprep.subr.mxu0 %v274
    %1139 = vmatpush1.msra.mxu0 %v273
    %1140 = vmatprep.subr.mxu0 %v278
    %1141 = vmatpush1.msra.mxu0 %v277
    %1142 = vmatprep.subr.mxu0 %v282
    %1143 = vmatpush1.msra.mxu0 %v281
    %1144 = vmatprep.subr.mxu0 %v286
    %1145 = vmatpush1.msra.mxu0 %v285
    %1146 = vmatprep.subr.mxu0 %v290
    %1147 = vmatpush1.msra.mxu0 %v289
    %1148 = vmatprep.subr.mxu0 %v294
    %1149 = vmatpush1.msra.mxu0 %v293
    %1150 = vmatprep.subr.mxu0 %v298
    %1151 = vmatpush1.msra.mxu0 %v297
    %1152 = vmatprep.subr.mxu0 %v302
    %1153 = vmatpush1.msra.mxu0 %v301
    %1154 = vmatprep.subr.mxu0 %v306
    %1155 = vmatpush1.msra.mxu0 %v305
    %1156 = vmatprep.subr.mxu0 %v310
    %1157 = vmatpush1.msra.mxu0 %v309
    %1158 = vmatprep.subr.mxu0 %v314
    %1159 = vmatpush1.msra.mxu0 %v313
    %1160 = vmatprep.subr.mxu0 %v318
    %1161 = vmatpush1.msra.mxu0 %v317
    %1162 = vmatprep.subr.mxu0 %v322
    %1163 = vmatpush1.msra.mxu0 %v321
    %1164 = vmatprep.subr.mxu0 %v326
    %1165 = vmatpush1.msra.mxu0 %v325
    %1166 = vmatprep.subr.mxu0 %v330
    %1167 = vmatpush1.msra.mxu0 %v329
    %1168 = vmatprep.subr.mxu0 0.0
    %1169 = vmatpush1.msra.mxu0 0.0
    %1170 = vmatprep.subr.mxu0 0.0
    %1171 = vmatpush1.msra.mxu0 0.0
    %1172 = vmatprep.subr.mxu0 0.0
    %1173 = vmatpush1.msra.mxu0 0.0
    %1174 = vmatprep.subr.mxu0 0.0
    %1175 = vmatpush1.msra.mxu0 0.0
    %1176 = vmatprep.subr.mxu0 0.0
    %1177 = vmatpush1.msra.mxu0 0.0
    %1178 = vmatprep.subr.mxu0 0.0
    %1179 = vmatpush1.msra.mxu0 0.0
    %1180 = vmatprep.subr.mxu0 0.0
    %1181 = vmatpush1.msra.mxu0 0.0
    %1182 = vmatprep.subr.mxu0 0.0
    %1183 = vmatpush1.msra.mxu0 0.0
    %1184 = vmatprep.subr.mxu0 0.0
    %1185 = vmatpush1.msra.mxu0 0.0
    %1186 = vmatprep.subr.mxu0 0.0
    %1187 = vmatpush1.msra.mxu0 0.0
    %1188 = vmatprep.subr.mxu0 0.0
    %1189 = vmatpush1.msra.mxu0 0.0
    %1190 = vmatprep.subr.mxu0 0.0
    %1191 = vmatpush1.msra.mxu0 0.0
    %1192 = vmatprep.subr.mxu0 0.0
    %1193 = vmatpush1.msra.mxu0 0.0
    %1194 = vmatprep.subr.mxu0 0.0
    %1195 = vmatpush1.msra.mxu0 0.0
    %1196 = vmatprep.subr.mxu0 0.0
    %1197 = vmatpush1.msra.mxu0 0.0
    %1198 = vmatprep.subr.mxu0 0.0
    %1199 = vmatpush1.msra.mxu0 0.0
    %1200 = vmatprep.mubr.f32.mxu0 0.0
    %1201 = vmatmul.mubr.f32.gmra.mrb[0].mxu0 %v1063
    %v1202 = vpop.f32.mrb[0].mxu0
    %v1203 = vadd.f32 0.0, %v1202
    %v1204 = vpop.f32.mrb[0].mxu0
    %v1205 = vadd.f32 0.0, %v1204
    %1206 = vdwg.mxu0
    %v1211 = vrot.slane %v1132, 4
    %v1212 = vrot.slane %v1134, 4
    %v1213 = vrot.slane %v1203, 4
    %v1214 = vrot.slane %v1205, 4
    %v1219 = vadd.f32 %v192, %v1211
    %v1220 = vadd.f32 %v194, %v1212
    %v1221 = vadd.f32 %v263, %v1213
    %v1222 = vadd.f32 %v265, %v1214
    %v1223 = vxor.u32 %v1219, 2147483648
    %v1224 = vmul.f32 %v1223, 1.442695
    %v1225 = vpow.pop %v1224
    %v1226 = vadd.f32 %v1225, 1.0
    %v1227 = vrcp.pop %v1226
    %v1228 = vmul.f32 1.0, %v1227
    %v1229 = vxor.u32 %v1220, 2147483648
    %v1230 = vmul.f32 %v1229, 1.442695
    %v1231 = vpow.pop %v1230
    %v1232 = vadd.f32 %v1231, 1.0
    %v1233 = vrcp.pop %v1232
    %v1234 = vmul.f32 1.0, %v1233
    %v1235 = vtanh.pop %v1221
    %v1236 = vxor.u32 %v1222, 2147483648
    %v1237 = vmul.f32 %v1236, 1.442695
    %v1238 = vpow.pop %v1237
    %v1239 = vadd.f32 %v1238, 1.0
    %v1240 = vrcp.pop %v1239
    %v1241 = vmul.f32 1.0, %v1240
    %v1243 = vrot.slane %v1059, 7
    %v1245 = vmul.f32 %v1234, %v1243
    %v1246 = vmul.f32 %v1228, %v1235
    %v1247 = vadd.f32 %v1245, %v1246
    %v1248 = vtanh.pop %v1247
    %v1249 = vmul.f32 %v1241, %v1248
    %v1251 = vrot.slane %v1249, 4
    %1253 = vmatprep.subr.mxu0 %v268
    %1254 = vmatpush1.msra.mxu0 %v267
    %1255 = vmatprep.subr.mxu0 %v272
    %1256 = vmatpush1.msra.mxu0 %v271
    %1257 = vmatprep.subr.mxu0 %v276
    %1258 = vmatpush1.msra.mxu0 %v275
    %1259 = vmatprep.subr.mxu0 %v280
    %1260 = vmatpush1.msra.mxu0 %v279
    %1261 = vmatprep.subr.mxu0 %v284
    %1262 = vmatpush1.msra.mxu0 %v283
    %1263 = vmatprep.subr.mxu0 %v288
    %1264 = vmatpush1.msra.mxu0 %v287
    %1265 = vmatprep.subr.mxu0 %v292
    %1266 = vmatpush1.msra.mxu0 %v291
    %1267 = vmatprep.subr.mxu0 %v296
    %1268 = vmatpush1.msra.mxu0 %v295
    %1269 = vmatprep.subr.mxu0 %v300
    %1270 = vmatpush1.msra.mxu0 %v299
    %1271 = vmatprep.subr.mxu0 %v304
    %1272 = vmatpush1.msra.mxu0 %v303
    %1273 = vmatprep.subr.mxu0 %v308
    %1274 = vmatpush1.msra.mxu0 %v307
    %1275 = vmatprep.subr.mxu0 %v312
    %1276 = vmatpush1.msra.mxu0 %v311
    %1277 = vmatprep.subr.mxu0 %v316
    %1278 = vmatpush1.msra.mxu0 %v315
    %1279 = vmatprep.subr.mxu0 %v320
    %1280 = vmatpush1.msra.mxu0 %v319
    %1281 = vmatprep.subr.mxu0 %v324
    %1282 = vmatpush1.msra.mxu0 %v323
    %1283 = vmatprep.subr.mxu0 %v328
    %1284 = vmatpush1.msra.mxu0 %v327
    %1285 = vmatprep.subr.mxu0 0.0
    %1286 = vmatpush1.msra.mxu0 0.0
    %1287 = vmatprep.subr.mxu0 0.0
    %1288 = vmatpush1.msra.mxu0 0.0
    %1289 = vmatprep.subr.mxu0 0.0
    %1290 = vmatpush1.msra.mxu0 0.0
    %1291 = vmatprep.subr.mxu0 0.0
    %1292 = vmatpush1.msra.mxu0 0.0
    %1293 = vmatprep.subr.mxu0 0.0
    %1294 = vmatpush1.msra.mxu0 0.0
    %1295 = vmatprep.subr.mxu0 0.0
    %1296 = vmatpush1.msra.mxu0 0.0
    %1297 = vmatprep.subr.mxu0 0.0
    %1298 = vmatpush1.msra.mxu0 0.0
    %1299 = vmatprep.subr.mxu0 0.0
    %1300 = vmatpush1.msra.mxu0 0.0
    %1301 = vmatprep.subr.mxu0 0.0
    %1302 = vmatpush1.msra.mxu0 0.0
    %1303 = vmatprep.subr.mxu0 0.0
    %1304 = vmatpush1.msra.mxu0 0.0
    %1305 = vmatprep.subr.mxu0 0.0
    %1306 = vmatpush1.msra.mxu0 0.0
    %1307 = vmatprep.subr.mxu0 0.0
    %1308 = vmatpush1.msra.mxu0 0.0
    %1309 = vmatprep.subr.mxu0 0.0
    %1310 = vmatpush1.msra.mxu0 0.0
    %1311 = vmatprep.subr.mxu0 0.0
    %1312 = vmatpush1.msra.mxu0 0.0
    %1313 = vmatprep.subr.mxu0 0.0
    %1314 = vmatpush1.msra.mxu0 0.0
    %1315 = vmatprep.subr.mxu0 0.0
    %1316 = vmatpush1.msra.mxu0 0.0
    %1317 = vmatprep.mubr.f32.mxu0 0.0
    %1318 = vmatmul.mubr.f32.gmra.mrb[0].mxu0 %v1251
    %v1319 = vpop.f32.mrb[0].mxu0
    %v1320 = vadd.f32 0.0, %v1319
    %v1321 = vpop.f32.mrb[0].mxu0
    %v1322 = vadd.f32 0.0, %v1321
    %1323 = vdwg.mxu0
    %1324 = vmatprep.subr.mxu0 %v270
    %1325 = vmatpush1.msra.mxu0 %v269
    %1326 = vmatprep.subr.mxu0 %v274
    %1327 = vmatpush1.msra.mxu0 %v273
    %1328 = vmatprep.subr.mxu0 %v278
    %1329 = vmatpush1.msra.mxu0 %v277
    %1330 = vmatprep.subr.mxu0 %v282
    %1331 = vmatpush1.msra.mxu0 %v281
    %1332 = vmatprep.subr.mxu0 %v286
    %1333 = vmatpush1.msra.mxu0 %v285
    %1334 = vmatprep.subr.mxu0 %v290
    %1335 = vmatpush1.msra.mxu0 %v289
    %1336 = vmatprep.subr.mxu0 %v294
    %1337 = vmatpush1.msra.mxu0 %v293
    %1338 = vmatprep.subr.mxu0 %v298
    %1339 = vmatpush1.msra.mxu0 %v297
    %1340 = vmatprep.subr.mxu0 %v302
    %1341 = vmatpush1.msra.mxu0 %v301
    %1342 = vmatprep.subr.mxu0 %v306
    %1343 = vmatpush1.msra.mxu0 %v305
    %1344 = vmatprep.subr.mxu0 %v310
    %1345 = vmatpush1.msra.mxu0 %v309
    %1346 = vmatprep.subr.mxu0 %v314
    %1347 = vmatpush1.msra.mxu0 %v313
    %1348 = vmatprep.subr.mxu0 %v318
    %1349 = vmatpush1.msra.mxu0 %v317
    %1350 = vmatprep.subr.mxu0 %v322
    %1351 = vmatpush1.msra.mxu0 %v321
    %1352 = vmatprep.subr.mxu0 %v326
    %1353 = vmatpush1.msra.mxu0 %v325
    %1354 = vmatprep.subr.mxu0 %v330
    %1355 = vmatpush1.msra.mxu0 %v329
    %1356 = vmatprep.subr.mxu0 0.0
    %1357 = vmatpush1.msra.mxu0 0.0
    %1358 = vmatprep.subr.mxu0 0.0
    %1359 = vmatpush1.msra.mxu0 0.0
    %1360 = vmatprep.subr.mxu0 0.0
    %1361 = vmatpush1.msra.mxu0 0.0
    %1362 = vmatprep.subr.mxu0 0.0
    %1363 = vmatpush1.msra.mxu0 0.0
    %1364 = vmatprep.subr.mxu0 0.0
    %1365 = vmatpush1.msra.mxu0 0.0
    %1366 = vmatprep.subr.mxu0 0.0
    %1367 = vmatpush1.msra.mxu0 0.0
    %1368 = vmatprep.subr.mxu0 0.0
    %1369 = vmatpush1.msra.mxu0 0.0
    %1370 = vmatprep.subr.mxu0 0.0
    %1371 = vmatpush1.msra.mxu0 0.0
    %1372 = vmatprep.subr.mxu0 0.0
    %1373 = vmatpush1.msra.mxu0 0.0
    %1374 = vmatprep.subr.mxu0 0.0
    %1375 = vmatpush1.msra.mxu0 0.0
    %1376 = vmatprep.subr.mxu0 0.0
    %1377 = vmatpush1.msra.mxu0 0.0
    %1378 = vmatprep.subr.mxu0 0.0
    %1379 = vmatpush1.msra.mxu0 0.0
    %1380 = vmatprep.subr.mxu0 0.0
    %1381 = vmatpush1.msra.mxu0 0.0
    %1382 = vmatprep.subr.mxu0 0.0
    %1383 = vmatpush1.msra.mxu0 0.0
    %1384 = vmatprep.subr.mxu0 0.0
    %1385 = vmatpush1.msra.mxu0 0.0
    %1386 = vmatprep.subr.mxu0 0.0
    %1387 = vmatpush1.msra.mxu0 0.0
    %1388 = vmatprep.mubr.f32.mxu0 0.0
    %1389 = vmatmul.mubr.f32.gmra.mrb[0].mxu0 %v1251
    %v1390 = vpop.f32.mrb[0].mxu0
    %v1391 = vadd.f32 0.0, %v1390
    %v1392 = vpop.f32.mrb[0].mxu0
    %v1393 = vadd.f32 0.0, %v1392
    %1394 = vdwg.mxu0
    %v1399 = vrot.slane %v1320, 3
    %v1400 = vrot.slane %v1322, 3
    %v1401 = vrot.slane %v1391, 3
    %v1402 = vrot.slane %v1393, 3
    %v1407 = vadd.f32 %v192, %v1399
    %v1408 = vadd.f32 %v194, %v1400
    %v1409 = vadd.f32 %v263, %v1401
    %v1410 = vadd.f32 %v265, %v1402
    %v1411 = vxor.u32 %v1407, 2147483648
    %v1412 = vmul.f32 %v1411, 1.442695
    %v1413 = vpow.pop %v1412
    %v1414 = vadd.f32 %v1413, 1.0
    %v1415 = vrcp.pop %v1414
    %v1416 = vmul.f32 1.0, %v1415
    %v1417 = vxor.u32 %v1408, 2147483648
    %v1418 = vmul.f32 %v1417, 1.442695
    %v1419 = vpow.pop %v1418
    %v1420 = vadd.f32 %v1419, 1.0
    %v1421 = vrcp.pop %v1420
    %v1422 = vmul.f32 1.0, %v1421
    %v1423 = vtanh.pop %v1409
    %v1424 = vxor.u32 %v1410, 2147483648
    %v1425 = vmul.f32 %v1424, 1.442695
    %v1426 = vpow.pop %v1425
    %v1427 = vadd.f32 %v1426, 1.0
    %v1428 = vrcp.pop %v1427
    %v1429 = vmul.f32 1.0, %v1428
    %v1431 = vrot.slane %v1247, 7
    %v1433 = vmul.f32 %v1422, %v1431
    %v1434 = vmul.f32 %v1416, %v1423
    %v1435 = vadd.f32 %v1433, %v1434
    %v1436 = vtanh.pop %v1435
    %v1437 = vmul.f32 %v1429, %v1436
    %v1439 = vrot.slane %v1437, 5
    %1441 = vmatprep.subr.mxu0 %v268
    %1442 = vmatpush1.msra.mxu0 %v267
    %1443 = vmatprep.subr.mxu0 %v272
    %1444 = vmatpush1.msra.mxu0 %v271
    %1445 = vmatprep.subr.mxu0 %v276
    %1446 = vmatpush1.msra.mxu0 %v275
    %1447 = vmatprep.subr.mxu0 %v280
    %1448 = vmatpush1.msra.mxu0 %v279
    %1449 = vmatprep.subr.mxu0 %v284
    %1450 = vmatpush1.msra.mxu0 %v283
    %1451 = vmatprep.subr.mxu0 %v288
    %1452 = vmatpush1.msra.mxu0 %v287
    %1453 = vmatprep.subr.mxu0 %v292
    %1454 = vmatpush1.msra.mxu0 %v291
    %1455 = vmatprep.subr.mxu0 %v296
    %1456 = vmatpush1.msra.mxu0 %v295
    %1457 = vmatprep.subr.mxu0 %v300
    %1458 = vmatpush1.msra.mxu0 %v299
    %1459 = vmatprep.subr.mxu0 %v304
    %1460 = vmatpush1.msra.mxu0 %v303
    %1461 = vmatprep.subr.mxu0 %v308
    %1462 = vmatpush1.msra.mxu0 %v307
    %1463 = vmatprep.subr.mxu0 %v312
    %1464 = vmatpush1.msra.mxu0 %v311
    %1465 = vmatprep.subr.mxu0 %v316
    %1466 = vmatpush1.msra.mxu0 %v315
    %1467 = vmatprep.subr.mxu0 %v320
    %1468 = vmatpush1.msra.mxu0 %v319
    %1469 = vmatprep.subr.mxu0 %v324
    %1470 = vmatpush1.msra.mxu0 %v323
    %1471 = vmatprep.subr.mxu0 %v328
    %1472 = vmatpush1.msra.mxu0 %v327
    %1473 = vmatprep.subr.mxu0 0.0
    %1474 = vmatpush1.msra.mxu0 0.0
    %1475 = vmatprep.subr.mxu0 0.0
    %1476 = vmatpush1.msra.mxu0 0.0
    %1477 = vmatprep.subr.mxu0 0.0
    %1478 = vmatpush1.msra.mxu0 0.0
    %1479 = vmatprep.subr.mxu0 0.0
    %1480 = vmatpush1.msra.mxu0 0.0
    %1481 = vmatprep.subr.mxu0 0.0
    %1482 = vmatpush1.msra.mxu0 0.0
    %1483 = vmatprep.subr.mxu0 0.0
    %1484 = vmatpush1.msra.mxu0 0.0
    %1485 = vmatprep.subr.mxu0 0.0
    %1486 = vmatpush1.msra.mxu0 0.0
    %1487 = vmatprep.subr.mxu0 0.0
    %1488 = vmatpush1.msra.mxu0 0.0
    %1489 = vmatprep.subr.mxu0 0.0
    %1490 = vmatpush1.msra.mxu0 0.0
    %1491 = vmatprep.subr.mxu0 0.0
    %1492 = vmatpush1.msra.mxu0 0.0
    %1493 = vmatprep.subr.mxu0 0.0
    %1494 = vmatpush1.msra.mxu0 0.0
    %1495 = vmatprep.subr.mxu0 0.0
    %1496 = vmatpush1.msra.mxu0 0.0
    %1497 = vmatprep.subr.mxu0 0.0
    %1498 = vmatpush1.msra.mxu0 0.0
    %1499 = vmatprep.subr.mxu0 0.0
    %1500 = vmatpush1.msra.mxu0 0.0
    %1501 = vmatprep.subr.mxu0 0.0
    %1502 = vmatpush1.msra.mxu0 0.0
    %1503 = vmatprep.subr.mxu0 0.0
    %1504 = vmatpush1.msra.mxu0 0.0
    %1505 = vmatprep.mubr.f32.mxu0 0.0
    %1506 = vmatmul.mubr.f32.gmra.mrb[0].mxu0 %v1439
    %v1507 = vpop.f32.mrb[0].mxu0
    %v1508 = vadd.f32 0.0, %v1507
    %v1509 = vpop.f32.mrb[0].mxu0
    %v1510 = vadd.f32 0.0, %v1509
    %1511 = vdwg.mxu0
    %1512 = vmatprep.subr.mxu0 %v270
    %1513 = vmatpush1.msra.mxu0 %v269
    %1514 = vmatprep.subr.mxu0 %v274
    %1515 = vmatpush1.msra.mxu0 %v273
    %1516 = vmatprep.subr.mxu0 %v278
    %1517 = vmatpush1.msra.mxu0 %v277
    %1518 = vmatprep.subr.mxu0 %v282
    %1519 = vmatpush1.msra.mxu0 %v281
    %1520 = vmatprep.subr.mxu0 %v286
    %1521 = vmatpush1.msra.mxu0 %v285
    %1522 = vmatprep.subr.mxu0 %v290
    %1523 = vmatpush1.msra.mxu0 %v289
    %1524 = vmatprep.subr.mxu0 %v294
    %1525 = vmatpush1.msra.mxu0 %v293
    %1526 = vmatprep.subr.mxu0 %v298
    %1527 = vmatpush1.msra.mxu0 %v297
    %1528 = vmatprep.subr.mxu0 %v302
    %1529 = vmatpush1.msra.mxu0 %v301
    %1530 = vmatprep.subr.mxu0 %v306
    %1531 = vmatpush1.msra.mxu0 %v305
    %1532 = vmatprep.subr.mxu0 %v310
    %1533 = vmatpush1.msra.mxu0 %v309
    %1534 = vmatprep.subr.mxu0 %v314
    %1535 = vmatpush1.msra.mxu0 %v313
    %1536 = vmatprep.subr.mxu0 %v318
    %1537 = vmatpush1.msra.mxu0 %v317
    %1538 = vmatprep.subr.mxu0 %v322
    %1539 = vmatpush1.msra.mxu0 %v321
    %1540 = vmatprep.subr.mxu0 %v326
    %1541 = vmatpush1.msra.mxu0 %v325
    %1542 = vmatprep.subr.mxu0 %v330
    %1543 = vmatpush1.msra.mxu0 %v329
    %1544 = vmatprep.subr.mxu0 0.0
    %1545 = vmatpush1.msra.mxu0 0.0
    %1546 = vmatprep.subr.mxu0 0.0
    %1547 = vmatpush1.msra.mxu0 0.0
    %1548 = vmatprep.subr.mxu0 0.0
    %1549 = vmatpush1.msra.mxu0 0.0
    %1550 = vmatprep.subr.mxu0 0.0
    %1551 = vmatpush1.msra.mxu0 0.0
    %1552 = vmatprep.subr.mxu0 0.0
    %1553 = vmatpush1.msra.mxu0 0.0
    %1554 = vmatprep.subr.mxu0 0.0
    %1555 = vmatpush1.msra.mxu0 0.0
    %1556 = vmatprep.subr.mxu0 0.0
    %1557 = vmatpush1.msra.mxu0 0.0
    %1558 = vmatprep.subr.mxu0 0.0
    %1559 = vmatpush1.msra.mxu0 0.0
    %1560 = vmatprep.subr.mxu0 0.0
    %1561 = vmatpush1.msra.mxu0 0.0
    %1562 = vmatprep.subr.mxu0 0.0
    %1563 = vmatpush1.msra.mxu0 0.0
    %1564 = vmatprep.subr.mxu0 0.0
    %1565 = vmatpush1.msra.mxu0 0.0
    %1566 = vmatprep.subr.mxu0 0.0
    %1567 = vmatpush1.msra.mxu0 0.0
    %1568 = vmatprep.subr.mxu0 0.0
    %1569 = vmatpush1.msra.mxu0 0.0
    %1570 = vmatprep.subr.mxu0 0.0
    %1571 = vmatpush1.msra.mxu0 0.0
    %1572 = vmatprep.subr.mxu0 0.0
    %1573 = vmatpush1.msra.mxu0 0.0
    %1574 = vmatprep.subr.mxu0 0.0
    %1575 = vmatpush1.msra.mxu0 0.0
    %1576 = vmatprep.mubr.f32.mxu0 0.0
    %1577 = vmatmul.mubr.f32.gmra.mrb[0].mxu0 %v1439
    %v1578 = vpop.f32.mrb[0].mxu0
    %v1579 = vadd.f32 0.0, %v1578
    %v1580 = vpop.f32.mrb[0].mxu0
    %v1581 = vadd.f32 0.0, %v1580
    %1582 = vdwg.mxu0
    %v1587 = vrot.slane %v1508, 2
    %v1588 = vrot.slane %v1510, 2
    %v1589 = vrot.slane %v1579, 2
    %v1590 = vrot.slane %v1581, 2
    %v1595 = vadd.f32 %v192, %v1587
    %v1596 = vadd.f32 %v194, %v1588
    %v1597 = vadd.f32 %v263, %v1589
    %v1598 = vadd.f32 %v265, %v1590
    %v1599 = vxor.u32 %v1595, 2147483648
    %v1600 = vmul.f32 %v1599, 1.442695
    %v1601 = vpow.pop %v1600
    %v1602 = vadd.f32 %v1601, 1.0
    %v1603 = vrcp.pop %v1602
    %v1604 = vmul.f32 1.0, %v1603
    %v1605 = vxor.u32 %v1596, 2147483648
    %v1606 = vmul.f32 %v1605, 1.442695
    %v1607 = vpow.pop %v1606
    %v1608 = vadd.f32 %v1607, 1.0
    %v1609 = vrcp.pop %v1608
    %v1610 = vmul.f32 1.0, %v1609
    %v1611 = vtanh.pop %v1597
    %v1612 = vxor.u32 %v1598, 2147483648
    %v1613 = vmul.f32 %v1612, 1.442695
    %v1614 = vpow.pop %v1613
    %v1615 = vadd.f32 %v1614, 1.0
    %v1616 = vrcp.pop %v1615
    %v1617 = vmul.f32 1.0, %v1616
    %v1619 = vrot.slane %v1435, 7
    %v1621 = vmul.f32 %v1610, %v1619
    %v1622 = vmul.f32 %v1604, %v1611
    %v1623 = vadd.f32 %v1621, %v1622
    %v1624 = vtanh.pop %v1623
    %v1625 = vmul.f32 %v1617, %v1624
    %v1627 = vrot.slane %v1625, 6
    %1629 = vmatprep.subr.mxu0 %v268
    %1630 = vmatpush1.msra.mxu0 %v267
    %1631 = vmatprep.subr.mxu0 %v272
    %1632 = vmatpush1.msra.mxu0 %v271
    %1633 = vmatprep.subr.mxu0 %v276
    %1634 = vmatpush1.msra.mxu0 %v275
    %1635 = vmatprep.subr.mxu0 %v280
    %1636 = vmatpush1.msra.mxu0 %v279
    %1637 = vmatprep.subr.mxu0 %v284
    %1638 = vmatpush1.msra.mxu0 %v283
    %1639 = vmatprep.subr.mxu0 %v288
    %1640 = vmatpush1.msra.mxu0 %v287
    %1641 = vmatprep.subr.mxu0 %v292
    %1642 = vmatpush1.msra.mxu0 %v291
    %1643 = vmatprep.subr.mxu0 %v296
    %1644 = vmatpush1.msra.mxu0 %v295
    %1645 = vmatprep.subr.mxu0 %v300
    %1646 = vmatpush1.msra.mxu0 %v299
    %1647 = vmatprep.subr.mxu0 %v304
    %1648 = vmatpush1.msra.mxu0 %v303
    %1649 = vmatprep.subr.mxu0 %v308
    %1650 = vmatpush1.msra.mxu0 %v307
    %1651 = vmatprep.subr.mxu0 %v312
    %1652 = vmatpush1.msra.mxu0 %v311
    %1653 = vmatprep.subr.mxu0 %v316
    %1654 = vmatpush1.msra.mxu0 %v315
    %1655 = vmatprep.subr.mxu0 %v320
    %1656 = vmatpush1.msra.mxu0 %v319
    %1657 = vmatprep.subr.mxu0 %v324
    %1658 = vmatpush1.msra.mxu0 %v323
    %1659 = vmatprep.subr.mxu0 %v328
    %1660 = vmatpush1.msra.mxu0 %v327
    %1661 = vmatprep.subr.mxu0 0.0
    %1662 = vmatpush1.msra.mxu0 0.0
    %1663 = vmatprep.subr.mxu0 0.0
    %1664 = vmatpush1.msra.mxu0 0.0
    %1665 = vmatprep.subr.mxu0 0.0
    %1666 = vmatpush1.msra.mxu0 0.0
    %1667 = vmatprep.subr.mxu0 0.0
    %1668 = vmatpush1.msra.mxu0 0.0
    %1669 = vmatprep.subr.mxu0 0.0
    %1670 = vmatpush1.msra.mxu0 0.0
    %1671 = vmatprep.subr.mxu0 0.0
    %1672 = vmatpush1.msra.mxu0 0.0
    %1673 = vmatprep.subr.mxu0 0.0
    %1674 = vmatpush1.msra.mxu0 0.0
    %1675 = vmatprep.subr.mxu0 0.0
    %1676 = vmatpush1.msra.mxu0 0.0
    %1677 = vmatprep.subr.mxu0 0.0
    %1678 = vmatpush1.msra.mxu0 0.0
    %1679 = vmatprep.subr.mxu0 0.0
    %1680 = vmatpush1.msra.mxu0 0.0
    %1681 = vmatprep.subr.mxu0 0.0
    %1682 = vmatpush1.msra.mxu0 0.0
    %1683 = vmatprep.subr.mxu0 0.0
    %1684 = vmatpush1.msra.mxu0 0.0
    %1685 = vmatprep.subr.mxu0 0.0
    %1686 = vmatpush1.msra.mxu0 0.0
    %1687 = vmatprep.subr.mxu0 0.0
    %1688 = vmatpush1.msra.mxu0 0.0
    %1689 = vmatprep.subr.mxu0 0.0
    %1690 = vmatpush1.msra.mxu0 0.0
    %1691 = vmatprep.subr.mxu0 0.0
    %1692 = vmatpush1.msra.mxu0 0.0
    %1693 = vmatprep.mubr.f32.mxu0 0.0
    %1694 = vmatmul.mubr.f32.gmra.mrb[0].mxu0 %v1627
    %v1695 = vpop.f32.mrb[0].mxu0
    %v1696 = vadd.f32 0.0, %v1695
    %v1697 = vpop.f32.mrb[0].mxu0
    %v1698 = vadd.f32 0.0, %v1697
    %1699 = vdwg.mxu0
    %1700 = vmatprep.subr.mxu0 %v270
    %1701 = vmatpush1.msra.mxu0 %v269
    %1702 = vmatprep.subr.mxu0 %v274
    %1703 = vmatpush1.msra.mxu0 %v273
    %1704 = vmatprep.subr.mxu0 %v278
    %1705 = vmatpush1.msra.mxu0 %v277
    %1706 = vmatprep.subr.mxu0 %v282
    %1707 = vmatpush1.msra.mxu0 %v281
    %1708 = vmatprep.subr.mxu0 %v286
    %1709 = vmatpush1.msra.mxu0 %v285
    %1710 = vmatprep.subr.mxu0 %v290
    %1711 = vmatpush1.msra.mxu0 %v289
    %1712 = vmatprep.subr.mxu0 %v294
    %1713 = vmatpush1.msra.mxu0 %v293
    %1714 = vmatprep.subr.mxu0 %v298
    %1715 = vmatpush1.msra.mxu0 %v297
    %1716 = vmatprep.subr.mxu0 %v302
    %1717 = vmatpush1.msra.mxu0 %v301
    %1718 = vmatprep.subr.mxu0 %v306
    %1719 = vmatpush1.msra.mxu0 %v305
    %1720 = vmatprep.subr.mxu0 %v310
    %1721 = vmatpush1.msra.mxu0 %v309
    %1722 = vmatprep.subr.mxu0 %v314
    %1723 = vmatpush1.msra.mxu0 %v313
    %1724 = vmatprep.subr.mxu0 %v318
    %1725 = vmatpush1.msra.mxu0 %v317
    %1726 = vmatprep.subr.mxu0 %v322
    %1727 = vmatpush1.msra.mxu0 %v321
    %1728 = vmatprep.subr.mxu0 %v326
    %1729 = vmatpush1.msra.mxu0 %v325
    %1730 = vmatprep.subr.mxu0 %v330
    %1731 = vmatpush1.msra.mxu0 %v329
    %1732 = vmatprep.subr.mxu0 0.0
    %1733 = vmatpush1.msra.mxu0 0.0
    %1734 = vmatprep.subr.mxu0 0.0
    %1735 = vmatpush1.msra.mxu0 0.0
    %1736 = vmatprep.subr.mxu0 0.0
    %1737 = vmatpush1.msra.mxu0 0.0
    %1738 = vmatprep.subr.mxu0 0.0
    %1739 = vmatpush1.msra.mxu0 0.0
    %1740 = vmatprep.subr.mxu0 0.0
    %1741 = vmatpush1.msra.mxu0 0.0
    %1742 = vmatprep.subr.mxu0 0.0
    %1743 = vmatpush1.msra.mxu0 0.0
    %1744 = vmatprep.subr.mxu0 0.0
    %1745 = vmatpush1.msra.mxu0 0.0
    %1746 = vmatprep.subr.mxu0 0.0
    %1747 = vmatpush1.msra.mxu0 0.0
    %1748 = vmatprep.subr.mxu0 0.0
    %1749 = vmatpush1.msra.mxu0 0.0
    %1750 = vmatprep.subr.mxu0 0.0
    %1751 = vmatpush1.msra.mxu0 0.0
    %1752 = vmatprep.subr.mxu0 0.0
    %1753 = vmatpush1.msra.mxu0 0.0
    %1754 = vmatprep.subr.mxu0 0.0
    %1755 = vmatpush1.msra.mxu0 0.0
    %1756 = vmatprep.subr.mxu0 0.0
    %1757 = vmatpush1.msra.mxu0 0.0
    %1758 = vmatprep.subr.mxu0 0.0
    %1759 = vmatpush1.msra.mxu0 0.0
    %1760 = vmatprep.subr.mxu0 0.0
    %1761 = vmatpush1.msra.mxu0 0.0
    %1762 = vmatprep.subr.mxu0 0.0
    %1763 = vmatpush1.msra.mxu0 0.0
    %1764 = vmatprep.mubr.f32.mxu0 0.0
    %1765 = vmatmul.mubr.f32.gmra.mrb[0].mxu0 %v1627
    %v1766 = vpop.f32.mrb[0].mxu0
    %v1767 = vadd.f32 0.0, %v1766
    %v1768 = vpop.f32.mrb[0].mxu0
    %v1769 = vadd.f32 0.0, %v1768
    %1770 = vdwg.mxu0
    %v1775 = vrot.slane %v1696, 1
    %v1776 = vrot.slane %v1698, 1
    %v1777 = vrot.slane %v1767, 1
    %v1778 = vrot.slane %v1769, 1
    %v1783 = vadd.f32 %v192, %v1775
    %v1784 = vadd.f32 %v194, %v1776
    %v1785 = vadd.f32 %v263, %v1777
    %v1786 = vadd.f32 %v265, %v1778
    %v1787 = vxor.u32 %v1783, 2147483648
    %v1788 = vmul.f32 %v1787, 1.442695
    %v1789 = vpow.pop %v1788
    %v1790 = vadd.f32 %v1789, 1.0
    %v1791 = vrcp.pop %v1790
    %v1792 = vmul.f32 1.0, %v1791
    %v1793 = vxor.u32 %v1784, 2147483648
    %v1794 = vmul.f32 %v1793, 1.442695
    %v1795 = vpow.pop %v1794
    %v1796 = vadd.f32 %v1795, 1.0
    %v1797 = vrcp.pop %v1796
    %v1798 = vmul.f32 1.0, %v1797
    %v1799 = vtanh.pop %v1785
    %v1800 = vxor.u32 %v1786, 2147483648
    %v1801 = vmul.f32 %v1800, 1.442695
    %v1802 = vpow.pop %v1801
    %v1803 = vadd.f32 %v1802, 1.0
    %v1804 = vrcp.pop %v1803
    %v1805 = vmul.f32 1.0, %v1804
    %v1807 = vrot.slane %v1623, 7
    %v1809 = vmul.f32 %v1798, %v1807
    %v1810 = vmul.f32 %v1792, %v1799
    %v1811 = vadd.f32 %v1809, %v1810
    %v1812 = vtanh.pop %v1811
    %v1813 = vmul.f32 %v1805, %v1812
    %vm1814 = vcmask 1040384
    %v1815 = vsel %vm1814, %v500, %v685
    %vm1816 = vcmask 1041408
    %v1817 = vsel %vm1816, %v1815, %v873
    %vm1818 = vcmask 1042432
    %v1819 = vsel %vm1818, %v1817, %v1061
    %vm1820 = vcmask 1043456
    %v1821 = vsel %vm1820, %v1819, %v1249
    %v1822 = vsel %vm112, %v1821, %v1437
    %vm1823 = vcmask 1045504
    %v1824 = vsel %vm1823, %v1822, %v1625
    %vm1825 = vcmask 1046528
    %v1826 = vsel %vm1825, %v1824, %v1813
    %v1827 = vld [vmem:[#allocation8] sm:$0xff]
    %v1828 = vld [vmem:[#allocation8 + $0x8] sm:$0xff]
    %v1829 = vld [vmem:[#allocation8 + $0x10] sm:$0xff]
    %v1830 = vld [vmem:[#allocation8 + $0x18] sm:$0xff]
    %v1831 = vld [vmem:[#allocation8 + $0x20] sm:$0xff]
    %v1832 = vld [vmem:[#allocation8 + $0x28] sm:$0xff]
    %v1833 = vld [vmem:[#allocation8 + $0x30] sm:$0xff]
    %v1834 = vld [vmem:[#allocation8 + $0x38] sm:$0xff]
    %v1835 = vld [vmem:[#allocation8 + $0x40] sm:$0xff]
    %v1836 = vld [vmem:[#allocation8 + $0x48] sm:$0xff]
    %v1837 = vld [vmem:[#allocation8 + $0x50] sm:$0xff]
    %v1838 = vld [vmem:[#allocation8 + $0x58] sm:$0xff]
    %v1839 = vld [vmem:[#allocation8 + $0x60] sm:$0xff]
    %v1840 = vld [vmem:[#allocation8 + $0x68] sm:$0xff]
    %v1841 = vld [vmem:[#allocation8 + $0x70] sm:$0xff]
    %v1842 = vld [vmem:[#allocation8 + $0x78] sm:$0xff]
    %v1843 = vld [vmem:[%s5] sm:$0x1]
    %v1845 = vlaneseq
    %v1846 = vshrl.u32 %v1845, 7
    %v1847 = vsub.s32 0, %v1846
    %v1848 = vrot.slane %v1843, %v1847
    %1850 = vmatprep.subr.mxu0 0.0
    %1851 = vmatpush1.msra.mxu0 %v1827
    %1852 = vmatprep.subr.mxu0 0.0
    %1853 = vmatpush1.msra.mxu0 %v1828
    %1854 = vmatprep.subr.mxu0 0.0
    %1855 = vmatpush1.msra.mxu0 %v1829
    %1856 = vmatprep.subr.mxu0 0.0
    %1857 = vmatpush1.msra.mxu0 %v1830
    %1858 = vmatprep.subr.mxu0 0.0
    %1859 = vmatpush1.msra.mxu0 %v1831
    %1860 = vmatprep.subr.mxu0 0.0
    %1861 = vmatpush1.msra.mxu0 %v1832
    %1862 = vmatprep.subr.mxu0 0.0
    %1863 = vmatpush1.msra.mxu0 %v1833
    %1864 = vmatprep.subr.mxu0 0.0
    %1865 = vmatpush1.msra.mxu0 %v1834
    %1866 = vmatprep.subr.mxu0 0.0
    %1867 = vmatpush1.msra.mxu0 %v1835
    %1868 = vmatprep.subr.mxu0 0.0
    %1869 = vmatpush1.msra.mxu0 %v1836
    %1870 = vmatprep.subr.mxu0 0.0
    %1871 = vmatpush1.msra.mxu0 %v1837
    %1872 = vmatprep.subr.mxu0 0.0
    %1873 = vmatpush1.msra.mxu0 %v1838
    %1874 = vmatprep.subr.mxu0 0.0
    %1875 = vmatpush1.msra.mxu0 %v1839
    %1876 = vmatprep.subr.mxu0 0.0
    %1877 = vmatpush1.msra.mxu0 %v1840
    %1878 = vmatprep.subr.mxu0 0.0
    %1879 = vmatpush1.msra.mxu0 %v1841
    %1880 = vmatprep.subr.mxu0 0.0
    %1881 = vmatpush1.msra.mxu0 %v1842
    %1882 = vmatprep.subr.mxu0 0.0
    %1883 = vmatpush1.msra.mxu0 0.0
    %1884 = vmatprep.subr.mxu0 0.0
    %1885 = vmatpush1.msra.mxu0 0.0
    %1886 = vmatprep.subr.mxu0 0.0
    %1887 = vmatpush1.msra.mxu0 0.0
    %1888 = vmatprep.subr.mxu0 0.0
    %1889 = vmatpush1.msra.mxu0 0.0
    %1890 = vmatprep.subr.mxu0 0.0
    %1891 = vmatpush1.msra.mxu0 0.0
    %1892 = vmatprep.subr.mxu0 0.0
    %1893 = vmatpush1.msra.mxu0 0.0
    %1894 = vmatprep.subr.mxu0 0.0
    %1895 = vmatpush1.msra.mxu0 0.0
    %1896 = vmatprep.subr.mxu0 0.0
    %1897 = vmatpush1.msra.mxu0 0.0
    %1898 = vmatprep.subr.mxu0 0.0
    %1899 = vmatpush1.msra.mxu0 0.0
    %1900 = vmatprep.subr.mxu0 0.0
    %1901 = vmatpush1.msra.mxu0 0.0
    %1902 = vmatprep.subr.mxu0 0.0
    %1903 = vmatpush1.msra.mxu0 0.0
    %1904 = vmatprep.subr.mxu0 0.0
    %1905 = vmatpush1.msra.mxu0 0.0
    %1906 = vmatprep.subr.mxu0 0.0
    %1907 = vmatpush1.msra.mxu0 0.0
    %1908 = vmatprep.subr.mxu0 0.0
    %1909 = vmatpush1.msra.mxu0 0.0
    %1910 = vmatprep.subr.mxu0 0.0
    %1911 = vmatpush1.msra.mxu0 0.0
    %1912 = vmatprep.subr.mxu0 0.0
    %1913 = vmatpush1.msra.mxu0 0.0
    %1914 = vmatprep.mubr.f32.mxu0 0.0
    %1915 = vmatmul.mubr.f32.gmra.mrb[0].mxu0 %v1826
    %v1916 = vpop.f32.mrb[0].mxu0
    %v1917 = vadd.f32 %v1848, %v1916
    %v1918 = vpop.f32.mrb[0].mxu0
    %1919 = vdwg.mxu0
    %1920 = vst [vmem:[#allocation10] sm:$0xff] %v1917
    // Predicated region
    $region42: #{tpu_custom_call.1} parent=1 // pred_check
      _
    $region43: #{tpu_custom_call.1} parent=1 // pred_check_branch
      %1922 = sbr.rel (0) target = $region45
    $region44: #{tpu_custom_call.1} parent=1 // pred_region
      %s1924 = ssub.s32 128, 128
      %1925 = vsyncadd [#allocation4], %s1924
      %s1927 = sshll.u32 [#allocation10], 4
      %s1928 = int_to_ptr.vmem [resolvable:$true] %s1927
      %1930 = dma.vmem_to_hbm [thread:$0]  %s1928, 128, %s6, [#allocation4]
    $region45: #{tpu_custom_call.1} parent=1 // pred_fallthru
      _
    // Predicated region
    $region46: #{tpu_custom_call.1} parent=1 // pred_check
      _
    $region47: #{tpu_custom_call.1} parent=1 // pred_check_branch
      %1932 = sbr.rel (0) target = $region49
    $region48: #{tpu_custom_call.1} parent=1 // pred_region
      %1933 = dma.done [#allocation4], 128
    $region49: #{tpu_custom_call.1} parent=1 // pred_fallthru
      _
    %1934 = vsyncpa [#allocation3], 1
    %1935 = vsyncpa [#allocation6], 1
    %1936 = vsyncpa [#allocation9], 1
    %1937 = vsyncpa [#allocation4], 1

</llo_original>
